<compile_context>
chip_gen: v7x
topology: tpu7x:2x2x1
jax: 0.10.0
libtpu: 0.0.40
codegen_flags: <defaults>
</compile_context>

<pallas_src>
import functools

import jax
import jax.numpy as jnp
from jax.experimental import pallas as pl
from jax.experimental.pallas import tpu as pltpu

_K = 28 * 28          # 784
_N_PAD = 128          # lane-dense final layer / output slab
_N_CLASSES = 10
_NEG_BIG = -1e30      # bias for padded classes: never wins the max, exp() == 0


def _elephantnet2_kernel(x_ref,
                         w1_ref, b1_ref,
                         w2_ref, b2_ref,
                         w3_ref, b3_ref,
                         w4_ref, b4_ref,
                         o_ref):
    """Fused forward for one batch tile: 3x (linear + relu), linear + log_softmax."""
    # f32 -> bf16 cast happens here (VPU), hidden under the input DMA; avoids a
    # separate host-side pad/cast pass over the dominant HBM stream.
    x = x_ref[...].astype(jnp.bfloat16)                                # (BM, 784)

    h = jnp.dot(x, w1_ref[...], preferred_element_type=jnp.float32) + b1_ref[...]
    h = jnp.maximum(h, 0.0).astype(jnp.bfloat16)

    h = jnp.dot(h, w2_ref[...], preferred_element_type=jnp.float32) + b2_ref[...]
    h = jnp.maximum(h, 0.0).astype(jnp.bfloat16)

    h = jnp.dot(h, w3_ref[...], preferred_element_type=jnp.float32) + b3_ref[...]
    h = jnp.maximum(h, 0.0).astype(jnp.bfloat16)

    # fc4 (padded to 128 output lanes) + log_softmax.  Padded logits are
    # ~ -1e30 (zero weights + -1e30 bias) so they never win the max and
    # contribute exp() == 0 to the denominator: identical to 10-class softmax.
    logits = jnp.dot(h, w4_ref[...], preferred_element_type=jnp.float32) + b4_ref[...]
    m = jnp.max(logits, axis=-1, keepdims=True)
    shifted = logits - m
    lse = jnp.log(jnp.sum(jnp.exp(shifted), axis=-1, keepdims=True))
    o_ref[...] = shifted - lse


@functools.partial(jax.jit, static_argnames=("block_m",))
def elephantnet2_forward(x, params, *, block_m=2048):
    """x: (B, 1, 28, 28) float32 NCHW.  Returns (B, 10) log-probabilities."""
    b = x.shape[0]
    (w1, b1), (w2, b2), (w3, b3), (w4, b4) = params

    # Flatten NCHW -> (B, 784), same as torch .view(-1, 784).  No pad, no cast:
    # the kernel consumes f32 directly.
    x2d = x.reshape(b, _K)

    # Weights to bf16 once (tiny, VMEM-resident across all grid steps).
    # fc4 padded to a 128-lane slab: zero weights + -1e30 bias so the padded
    # classes vanish in the softmax.
    w1b = w1.astype(jnp.bfloat16)
    w2b = w2.astype(jnp.bfloat16)
    w3b = w3.astype(jnp.bfloat16)
    w4b = jnp.pad(w4, ((0, 0), (0, _N_PAD - w4.shape[1]))).astype(jnp.bfloat16)
    b4p = jnp.pad(b4, ((0, 0), (0, _N_PAD - b4.shape[1])), constant_values=_NEG_BIG)

    # Batch tiling: pipelined 1-D grid over batch tiles; weights stay resident.
    #  * ensure >= 2 grid steps when b > 8 so the "parallel" axis can shard
    #    across v7x's two TensorCores,
    #  * sublane-align bm (multiple of 8) unless it equals the full batch,
    #  * ragged last block: OOB rows are garbage on read (row-independent math)
    #    and dropped on writeback -- no batch-pad copy in HBM.
    bm = min(block_m, b)
    if bm == b and b > 8:
        bm = -(-b // 2)
    if bm != b and bm % 8 != 0:
        bm = -(-bm // 8) * 8
    grid = (pl.cdiv(b, bm),)

    tile_map = lambda i: (i, 0)       # batch-tiled arrays (x, out)
    resident_map = lambda i: (0, 0)   # weights/biases: same block every step

    weight_args = (w1b, b1, w2b, b2, w3b, b3, w4b, b4p)
    weight_specs = [pl.BlockSpec(w.shape, resident_map) for w in weight_args]

    flops = 2 * b * (_K * 256 + 256 * 128 + 128 * 128 + 128 * _N_PAD)
    bytes_accessed = (
        int(x2d.size) * 4
        + sum(int(w.size) * w.dtype.itemsize for w in weight_args)
        + b * _N_PAD * 4
    )

    out = pl.pallas_call(
        _elephantnet2_kernel,
        out_shape=jax.ShapeDtypeStruct((b, _N_PAD), jnp.float32),
        grid=grid,
        in_specs=[pl.BlockSpec((bm, _K), tile_map)] + weight_specs,
        out_specs=pl.BlockSpec((bm, _N_PAD), tile_map),
        compiler_params=pltpu.CompilerParams(
            dimension_semantics=("parallel",),
            vmem_limit_bytes=64 * 1024 * 1024,
        ),
        cost_estimate=pl.CostEstimate(
            flops=flops,
            transcendentals=b * _N_PAD,
            bytes_accessed=bytes_accessed,
        ),
    )(x2d, *weight_args)

    return out[:, :_N_CLASSES]


def init_params(key):
    """Deterministic init matching the layer shapes:
       fc1: 784->256, fc2: 256->128, fc3: 128->128, fc4: 128->10."""
    dims = [(_K, 256), (256, 128), (128, 128), (128, _N_CLASSES)]
    params = []
    for i, (d_in, d_out) in enumerate(dims):
        kw, kb, key = jax.random.split(jax.random.fold_in(key, i), 3)
        scale = 1.0 / jnp.sqrt(jnp.float32(d_in))
        w = jax.random.uniform(kw, (d_in, d_out), jnp.float32, -scale, scale)
        bias = jax.random.uniform(kb, (1, d_out), jnp.float32, -scale, scale)
        params.append((w, bias))
    return params


def reference_forward(x, params, *, use_bf16=False):
    """Pure-JAX reference.  use_bf16=True mirrors the kernel's mixed precision."""
    b = x.shape[0]
    h = x.reshape(b, _K).astype(jnp.float32)
    cast = (lambda a: a.astype(jnp.bfloat16)) if use_bf16 else (lambda a: a)
    for i, (w, bias) in enumerate(params):
        h = jnp.dot(cast(h), cast(w), preferred_element_type=jnp.float32) + bias
        if i < 3:
            h = jnp.maximum(h, 0.0)
    return jax.nn.log_softmax(h, axis=-1)


if __name__ == "__main__":
    key = jax.random.PRNGKey(0)
    params = init_params(key)

    # block_m=16 at these small batches -> a 2-step grid is always exercised;
    # batch=30 additionally exercises the ragged last block (OOB rows masked
    # on writeback, no batch-pad copy).
    for batch in (32, 30):
        x = jax.random.normal(jax.random.fold_in(key, batch),
                              (batch, 1, 28, 28), dtype=jnp.float32)

        out = jax.block_until_ready(elephantnet2_forward(x, params, block_m=16))
        assert out.shape == (batch, _N_CLASSES), out.shape

        # Tight check against a reference using the same bf16 mixed precision.
        ref_bf16 = reference_forward(x, params, use_bf16=True)
        assert jnp.allclose(out, ref_bf16, atol=5e-3, rtol=5e-3), \
            float(jnp.max(jnp.abs(out - ref_bf16)))

        # Looser sanity check against the full-f32 reference (bf16 rounding only).
        ref_f32 = reference_forward(x, params, use_bf16=False)
        assert jnp.allclose(out, ref_f32, atol=1.5e-1, rtol=1.5e-1), \
            float(jnp.max(jnp.abs(out - ref_f32)))

    print("KERNEL_OK")
</pallas_src>

<mosaic_0001>
module attributes {stable_mosaic.version = 11 : i64} {
  func.func @_elephantnet2_kernel(%arg0: i32, %arg1: memref<16x784xf32, #tpu.memory_space<vmem>>, %arg2: memref<784x256xbf16, #tpu.memory_space<vmem>>, %arg3: memref<1x256xf32, #tpu.memory_space<vmem>>, %arg4: memref<256x128xbf16, #tpu.memory_space<vmem>>, %arg5: memref<1x128xf32, #tpu.memory_space<vmem>>, %arg6: memref<128x128xbf16, #tpu.memory_space<vmem>>, %arg7: memref<1x128xf32, #tpu.memory_space<vmem>>, %arg8: memref<128x128xbf16, #tpu.memory_space<vmem>>, %arg9: memref<1x128xf32, #tpu.memory_space<vmem>>, %arg10: memref<16x128xf32, #tpu.memory_space<vmem>>) attributes {dimension_semantics = [#tpu.dimension_semantics<parallel>], iteration_bounds = array<i64: 2>, scalar_prefetch = 0 : i64, scratch_operands = 0 : i64, tpu.core_type = #tpu.core_type<tc>, window_params = [{transform_indices = @transform_0, window_bounds = array<i64: 16, 784>}, {pipeline_mode = #tpu.pipeline_mode<synchronous>, transform_indices = @transform_1, window_bounds = array<i64: 784, 256>}, {pipeline_mode = #tpu.pipeline_mode<synchronous>, transform_indices = @transform_2, window_bounds = array<i64: 1, 256>}, {pipeline_mode = #tpu.pipeline_mode<synchronous>, transform_indices = @transform_3, window_bounds = array<i64: 256, 128>}, {pipeline_mode = #tpu.pipeline_mode<synchronous>, transform_indices = @transform_4, window_bounds = array<i64: 1, 128>}, {pipeline_mode = #tpu.pipeline_mode<synchronous>, transform_indices = @transform_5, window_bounds = array<i64: 128, 128>}, {pipeline_mode = #tpu.pipeline_mode<synchronous>, transform_indices = @transform_6, window_bounds = array<i64: 1, 128>}, {pipeline_mode = #tpu.pipeline_mode<synchronous>, transform_indices = @transform_7, window_bounds = array<i64: 128, 128>}, {pipeline_mode = #tpu.pipeline_mode<synchronous>, transform_indices = @transform_8, window_bounds = array<i64: 1, 128>}, {transform_indices = @transform_9, window_bounds = array<i64: 16, 128>}]} {
    %c0 = arith.constant 0 : index
    %c0_0 = arith.constant 0 : index
    %0 = vector.load %arg1[%c0, %c0_0] : memref<16x784xf32, #tpu.memory_space<vmem>>, vector<16x784xf32>
    %1 = arith.truncf %0 : vector<16x784xf32> to vector<16x784xbf16>
    %c0_1 = arith.constant 0 : index
    %c0_2 = arith.constant 0 : index
    %2 = vector.load %arg2[%c0_1, %c0_2] : memref<784x256xbf16, #tpu.memory_space<vmem>>, vector<784x256xbf16>
    %cst = arith.constant dense<0.000000e+00> : vector<16x256xf32>
    %3 = tpu.matmul %1, %2, %cst {dimension_numbers = #tpu.dot_dimension_numbers<[1], [0], [0], [1], [0, 0, 1, 1], [], []>} : vector<16x784xbf16>, vector<784x256xbf16>, vector<16x256xf32> -> vector<16x256xf32>
    %c0_3 = arith.constant 0 : index
    %c0_4 = arith.constant 0 : index
    %4 = vector.load %arg3[%c0_3, %c0_4] : memref<1x256xf32, #tpu.memory_space<vmem>>, vector<1x256xf32>
    %5 = vector.broadcast %4 : vector<1x256xf32> to vector<16x256xf32>
    %6 = arith.addf %3, %5 : vector<16x256xf32>
    %cst_5 = arith.constant 0.000000e+00 : f32
    %7 = vector.broadcast %cst_5 : f32 to vector<16x256xf32>
    %8 = arith.maximumf %6, %7 : vector<16x256xf32>
    %9 = arith.truncf %8 : vector<16x256xf32> to vector<16x256xbf16>
    %c0_6 = arith.constant 0 : index
    %c0_7 = arith.constant 0 : index
    %10 = vector.load %arg4[%c0_6, %c0_7] : memref<256x128xbf16, #tpu.memory_space<vmem>>, vector<256x128xbf16>
    %cst_8 = arith.constant dense<0.000000e+00> : vector<16x128xf32>
    %11 = tpu.matmul %9, %10, %cst_8 {dimension_numbers = #tpu.dot_dimension_numbers<[1], [0], [0], [1], [0, 0, 1, 1], [], []>} : vector<16x256xbf16>, vector<256x128xbf16>, vector<16x128xf32> -> vector<16x128xf32>
    %c0_9 = arith.constant 0 : index
    %c0_10 = arith.constant 0 : index
    %12 = vector.load %arg5[%c0_9, %c0_10] : memref<1x128xf32, #tpu.memory_space<vmem>>, vector<1x128xf32>
    %13 = vector.broadcast %12 : vector<1x128xf32> to vector<16x128xf32>
    %14 = arith.addf %11, %13 : vector<16x128xf32>
    %cst_11 = arith.constant 0.000000e+00 : f32
    %15 = vector.broadcast %cst_11 : f32 to vector<16x128xf32>
    %16 = arith.maximumf %14, %15 : vector<16x128xf32>
    %17 = arith.truncf %16 : vector<16x128xf32> to vector<16x128xbf16>
    %c0_12 = arith.constant 0 : index
    %c0_13 = arith.constant 0 : index
    %18 = vector.load %arg6[%c0_12, %c0_13] : memref<128x128xbf16, #tpu.memory_space<vmem>>, vector<128x128xbf16>
    %cst_14 = arith.constant dense<0.000000e+00> : vector<16x128xf32>
    %19 = tpu.matmul %17, %18, %cst_14 {dimension_numbers = #tpu.dot_dimension_numbers<[1], [0], [0], [1], [0, 0, 1, 1], [], []>} : vector<16x128xbf16>, vector<128x128xbf16>, vector<16x128xf32> -> vector<16x128xf32>
    %c0_15 = arith.constant 0 : index
    %c0_16 = arith.constant 0 : index
    %20 = vector.load %arg7[%c0_15, %c0_16] : memref<1x128xf32, #tpu.memory_space<vmem>>, vector<1x128xf32>
    %21 = vector.broadcast %20 : vector<1x128xf32> to vector<16x128xf32>
    %22 = arith.addf %19, %21 : vector<16x128xf32>
    %cst_17 = arith.constant 0.000000e+00 : f32
    %23 = vector.broadcast %cst_17 : f32 to vector<16x128xf32>
    %24 = arith.maximumf %22, %23 : vector<16x128xf32>
    %25 = arith.truncf %24 : vector<16x128xf32> to vector<16x128xbf16>
    %c0_18 = arith.constant 0 : index
    %c0_19 = arith.constant 0 : index
    %26 = vector.load %arg8[%c0_18, %c0_19] : memref<128x128xbf16, #tpu.memory_space<vmem>>, vector<128x128xbf16>
    %cst_20 = arith.constant dense<0.000000e+00> : vector<16x128xf32>
    %27 = tpu.matmul %25, %26, %cst_20 {dimension_numbers = #tpu.dot_dimension_numbers<[1], [0], [0], [1], [0, 0, 1, 1], [], []>} : vector<16x128xbf16>, vector<128x128xbf16>, vector<16x128xf32> -> vector<16x128xf32>
    %c0_21 = arith.constant 0 : index
    %c0_22 = arith.constant 0 : index
    %28 = vector.load %arg9[%c0_21, %c0_22] : memref<1x128xf32, #tpu.memory_space<vmem>>, vector<1x128xf32>
    %29 = vector.broadcast %28 : vector<1x128xf32> to vector<16x128xf32>
    %30 = arith.addf %27, %29 : vector<16x128xf32>
    %cst_23 = arith.constant dense<0xFF800000> : vector<16xf32>
    %31 = vector.multi_reduction <maximumf>, %30, %cst_23 [1] : vector<16x128xf32> to vector<16xf32>
    %32 = vector.shape_cast %31 : vector<16xf32> to vector<16x1xf32>
    %33 = vector.broadcast %32 : vector<16x1xf32> to vector<16x128xf32>
    %34 = arith.subf %30, %33 : vector<16x128xf32>
    %35 = math.exp %34 : vector<16x128xf32>
    %cst_24 = arith.constant dense<0.000000e+00> : vector<16xf32>
    %36 = vector.multi_reduction <add>, %35, %cst_24 [1] : vector<16x128xf32> to vector<16xf32>
    %37 = vector.shape_cast %36 : vector<16xf32> to vector<16x1xf32>
    %38 = math.log %37 : vector<16x1xf32>
    %39 = vector.broadcast %38 : vector<16x1xf32> to vector<16x128xf32>
    %40 = arith.subf %34, %39 : vector<16x128xf32>
    %c0_25 = arith.constant 0 : index
    %c0_26 = arith.constant 0 : index
    %41 = vector.load %arg10[%c0_25, %c0_26] : memref<16x128xf32, #tpu.memory_space<vmem>>, vector<16x128xf32>
    tpu.vector_store %arg10[%c0_25, %c0_26], %40 {strides = array<i32>} : memref<16x128xf32, #tpu.memory_space<vmem>>, vector<16x128xf32>,
    return
  }
  func.func @transform_0(%arg0: i32) -> (i32, i32) {
    %c0_i32 = arith.constant 0 : i32
    %c0_i32_0 = arith.constant 0 : i32
    return %arg0, %c0_i32 : i32, i32
  }
  func.func @transform_1(%arg0: i32) -> (i32, i32) {
    %c0_i32 = arith.constant 0 : i32
    %c0_i32_0 = arith.constant 0 : i32
    %c0_i32_1 = arith.constant 0 : i32
    return %c0_i32, %c0_i32_0 : i32, i32
  }
  func.func @transform_2(%arg0: i32) -> (i32, i32) {
    %c0_i32 = arith.constant 0 : i32
    %c0_i32_0 = arith.constant 0 : i32
    %c0_i32_1 = arith.constant 0 : i32
    return %c0_i32, %c0_i32_0 : i32, i32
  }
  func.func @transform_3(%arg0: i32) -> (i32, i32) {
    %c0_i32 = arith.constant 0 : i32
    %c0_i32_0 = arith.constant 0 : i32
    %c0_i32_1 = arith.constant 0 : i32
    return %c0_i32, %c0_i32_0 : i32, i32
  }
  func.func @transform_4(%arg0: i32) -> (i32, i32) {
    %c0_i32 = arith.constant 0 : i32
    %c0_i32_0 = arith.constant 0 : i32
    %c0_i32_1 = arith.constant 0 : i32
    return %c0_i32, %c0_i32_0 : i32, i32
  }
  func.func @transform_5(%arg0: i32) -> (i32, i32) {
    %c0_i32 = arith.constant 0 : i32
    %c0_i32_0 = arith.constant 0 : i32
    %c0_i32_1 = arith.constant 0 : i32
    return %c0_i32, %c0_i32_0 : i32, i32
  }
  func.func @transform_6(%arg0: i32) -> (i32, i32) {
    %c0_i32 = arith.constant 0 : i32
    %c0_i32_0 = arith.constant 0 : i32
    %c0_i32_1 = arith.constant 0 : i32
    return %c0_i32, %c0_i32_0 : i32, i32
  }
  func.func @transform_7(%arg0: i32) -> (i32, i32) {
    %c0_i32 = arith.constant 0 : i32
    %c0_i32_0 = arith.constant 0 : i32
    %c0_i32_1 = arith.constant 0 : i32
    return %c0_i32, %c0_i32_0 : i32, i32
  }
  func.func @transform_8(%arg0: i32) -> (i32, i32) {
    %c0_i32 = arith.constant 0 : i32
    %c0_i32_0 = arith.constant 0 : i32
    %c0_i32_1 = arith.constant 0 : i32
    return %c0_i32, %c0_i32_0 : i32, i32
  }
  func.func @transform_9(%arg0: i32) -> (i32, i32) {
    %c0_i32 = arith.constant 0 : i32
    %c0_i32_0 = arith.constant 0 : i32
    return %arg0, %c0_i32 : i32, i32
  }
}

</mosaic_0001>

<llo_original>
// kernel: elephantnet2_forward.1
$region0: #{elephantnet2_forward.1}
  #allocation0 [shape = 'u32[]', space=smem, size = 0x4, offset = 0x4, fixed_abs, tag = 'smem constant byte address 0x4 - core index']
  #allocation1 [shape = 'u32[144,128]{1,0:T(1,128)}', space=vmem, size = 0x12000, scoped, tag = 'internal scratch']
  %s0 = inlined_call_operand.hbm [shape: f32[32,784], index: 0, kind: input, shape index: {}]
  %s1 = inlined_call_operand.hbm [shape: bf16[784,256], index: 1, kind: input, shape index: {}]
  %s2 = inlined_call_operand.hbm [shape: f32[1,256], index: 2, kind: input, shape index: {}]
  %s3 = inlined_call_operand.hbm [shape: bf16[256,128], index: 3, kind: input, shape index: {}]
  %s4 = inlined_call_operand.hbm [shape: f32[1,128], index: 4, kind: input, shape index: {}]
  %s5 = inlined_call_operand.hbm [shape: bf16[128,128], index: 5, kind: input, shape index: {}]
  %s6 = inlined_call_operand.hbm [shape: f32[1,128], index: 6, kind: input, shape index: {}]
  %s7 = inlined_call_operand.hbm [shape: bf16[128,128], index: 7, kind: input, shape index: {}]
  %s8 = inlined_call_operand.hbm [shape: f32[1,128], index: 8, kind: input, shape index: {}]
  %s9 = inlined_call_operand.hbm [shape: f32[32,128], index: 9, kind: output, shape index: {}]
  %s10 = sld [smem:[#allocation0]]
  $region105: #{elephantnet2_forward.1} parent=0
    _
  %s12 = ssub.s32 1, %s10
  %s13 = scalar_select 0, %s12, %s10
  $region1: #{elephantnet2_forward.1} parent=0
    #allocation2 [shape = 'u8[114688]{0}', space=vmem, size = 0x1c000, scoped, tag = 'input window, operand 0']
    #allocation3 [shape = 's32[2]{0}', space=sflag, size = 0x8, scoped, tag = 'scoped memory for elephantnet2_forward.1']
    #allocation4 [shape = 's32[2]{0}', space=sflag, size = 0x8, scoped, tag = 'scoped memory for elephantnet2_forward.1']
    #allocation5 [shape = 'u8[401408]{0}', space=vmem, size = 0x62000, scoped, tag = 'input window, operand 1, single buffered']
    #allocation6 [shape = 's32[1]{0}', space=sflag, size = 0x4, scoped, tag = 'scoped memory for elephantnet2_forward.1']
    #allocation7 [shape = 'u8[1024]{0}', space=vmem, size = 0x400, scoped, tag = 'input window, operand 2, single buffered']
    #allocation8 [shape = 'u8[65536]{0}', space=vmem, size = 0x10000, scoped, tag = 'input window, operand 3, single buffered']
    #allocation9 [shape = 's32[1]{0}', space=sflag, size = 0x4, scoped, tag = 'scoped memory for elephantnet2_forward.1']
    #allocation10 [shape = 'u8[512]{0}', space=vmem, size = 0x400, scoped, tag = 'input window, operand 4, single buffered']
    #allocation11 [shape = 'u8[32768]{0}', space=vmem, size = 0x8000, scoped, tag = 'input window, operand 5, single buffered']
    #allocation12 [shape = 's32[1]{0}', space=sflag, size = 0x4, scoped, tag = 'scoped memory for elephantnet2_forward.1']
    #allocation13 [shape = 'u8[512]{0}', space=vmem, size = 0x400, scoped, tag = 'input window, operand 6, single buffered']
    #allocation14 [shape = 'u8[32768]{0}', space=vmem, size = 0x8000, scoped, tag = 'input window, operand 7, single buffered']
    #allocation15 [shape = 's32[1]{0}', space=sflag, size = 0x4, scoped, tag = 'scoped memory for elephantnet2_forward.1']
    #allocation16 [shape = 'u8[512]{0}', space=vmem, size = 0x400, scoped, tag = 'input window, operand 8, single buffered']
    #allocation17 [shape = 'u8[16384]{0}', space=vmem, size = 0x4000, scoped, tag = 'output window, operand 0']
    %14 = vsyncpa [#allocation3], 0
    %s15 = scalar_lea.sflag [#allocation3], 1
    %16 = vsyncpa %s15, 0
    %17 = vsyncpa [#allocation6], 0
    %18 = vsyncpa [#allocation9], 0
    %19 = vsyncpa [#allocation12], 0
    %20 = vsyncpa [#allocation15], 0
    %21 = vsyncpa [#allocation4], 0
    %s22 = scalar_lea.sflag [#allocation4], 1
    %23 = vsyncpa %s22, 0
    loop: start=0, step=1, limit=4
    $region2: #{elephantnet2_forward.1} parent=1 // loop_pre_header
      _
    $region3: #{elephantnet2_forward.1} parent=1 // loop_header
      %s25 = sphi 0, %s29
      %p26 = scmp.ge.s32.totalorder %s25, 4
      %s35 = sphi 0, %s37
      %s38 = sphi 0, %s35
      %s39 = sphi 0, %s38
      %s55 = sphi 0, %s39
      %s59 = sphi 0, %s59
      %s61 = sphi 0, %s59
      %s62 = sphi 0, %s61
      %s76 = sphi 0, %s62
      %s80 = sphi 0, %s80
      %s82 = sphi 0, %s80
      %s83 = sphi 0, %s82
      %s97 = sphi 0, %s83
      %s101 = sphi 0, %s101
      %s103 = sphi 0, %s101
      %s104 = sphi 0, %s103
      %s118 = sphi 0, %s104
      %s122 = sphi 0, %s122
      %s124 = sphi 0, %s122
      %s125 = sphi 0, %s124
      %s139 = sphi 0, %s125
      %s143 = sphi 0, %s143
      %s145 = sphi 0, %s143
      %s146 = sphi 0, %s145
      %s160 = sphi 0, %s146
      %s164 = sphi 0, %s164
      %s166 = sphi 0, %s164
      %s167 = sphi 0, %s166
      %s181 = sphi 0, %s167
      %s185 = sphi 0, %s185
      %s187 = sphi 0, %s185
      %s188 = sphi 0, %s187
      %s202 = sphi 0, %s188
      %s206 = sphi 0, %s206
      %s208 = sphi 0, %s206
      %s209 = sphi 0, %s208
      %s223 = sphi 0, %s209
      %s229 = sphi 0, %s231
      %s232 = sphi 0, %s229
      %s233 = sphi 0, %s232
      %s249 = sphi 0, %s233
    $region4: #{elephantnet2_forward.1} parent=1 // loop_header_branch
      %28 = sbr.rel (%p26) target = $region8
    $region5: #{elephantnet2_forward.1} parent=1 // loop_body
      %s30 = ssub.s32 %s25, 1
      %s31 = ssub.s32 %s25, 2
      %s32 = sadd.s32 %s25, 1
      %s33 = ssub.s32 %s25, %s32
      %p34 = scmp.eq.s32.totalorder %s33, 0
      %s36 = sadd.s32 %s35, 1
      %s37 = scalar_select %p34, %s35, %s36
      %p40 = pneg %p34
      %p41 = scmp.eq.s32.totalorder %s25, 1
      %p42 = por %p40, %p41
      %p43 = scmp.ne.s32.totalorder %s35, %s38
      %p44 = scmp.eq.s32.totalorder %s25, 0
      %p45 = por %p43, %p44
      %p46 = scmp.ne.s32.totalorder %s35, %s38
      %p47 = scmp.eq.s32.totalorder %s30, 1
      %p48 = por %p46, %p47
      %p49 = scmp.ne.s32.totalorder %s38, %s39
      %p50 = scmp.eq.s32.totalorder %s30, 0
      %p51 = por %p49, %p50
      %p52 = scmp.ne.s32.totalorder %s38, %s39
      %p53 = scmp.eq.s32.totalorder %s31, 1
      %p54 = por %p52, %p53
      %p56 = scmp.ne.s32.totalorder %s39, %s55
      %p57 = scmp.eq.s32.totalorder %s31, 0
      %p58 = por %p56, %p57
      %s60 = sadd.s32 %s59, 1
      %p63 = scmp.eq.s32.totalorder %s25, 1
      %p64 = scmp.ne.s32.totalorder %s59, %s61
      %p65 = scmp.eq.s32.totalorder %s25, 0
      %p66 = por %p64, %p65
      %p67 = scmp.ne.s32.totalorder %s59, %s61
      %p68 = scmp.eq.s32.totalorder %s30, 1
      %p69 = por %p67, %p68
      %p70 = scmp.ne.s32.totalorder %s61, %s62
      %p71 = scmp.eq.s32.totalorder %s30, 0
      %p72 = por %p70, %p71
      %p73 = scmp.ne.s32.totalorder %s61, %s62
      %p74 = scmp.eq.s32.totalorder %s31, 1
      %p75 = por %p73, %p74
      %p77 = scmp.ne.s32.totalorder %s62, %s76
      %p78 = scmp.eq.s32.totalorder %s31, 0
      %p79 = por %p77, %p78
      %s81 = sadd.s32 %s80, 1
      %p84 = scmp.eq.s32.totalorder %s25, 1
      %p85 = scmp.ne.s32.totalorder %s80, %s82
      %p86 = scmp.eq.s32.totalorder %s25, 0
      %p87 = por %p85, %p86
      %p88 = scmp.ne.s32.totalorder %s80, %s82
      %p89 = scmp.eq.s32.totalorder %s30, 1
      %p90 = por %p88, %p89
      %p91 = scmp.ne.s32.totalorder %s82, %s83
      %p92 = scmp.eq.s32.totalorder %s30, 0
      %p93 = por %p91, %p92
      %p94 = scmp.ne.s32.totalorder %s82, %s83
      %p95 = scmp.eq.s32.totalorder %s31, 1
      %p96 = por %p94, %p95
      %p98 = scmp.ne.s32.totalorder %s83, %s97
      %p99 = scmp.eq.s32.totalorder %s31, 0
      %p100 = por %p98, %p99
      %s102 = sadd.s32 %s101, 1
      %p105 = scmp.eq.s32.totalorder %s25, 1
      %p106 = scmp.ne.s32.totalorder %s101, %s103
      %p107 = scmp.eq.s32.totalorder %s25, 0
      %p108 = por %p106, %p107
      %p109 = scmp.ne.s32.totalorder %s101, %s103
      %p110 = scmp.eq.s32.totalorder %s30, 1
      %p111 = por %p109, %p110
      %p112 = scmp.ne.s32.totalorder %s103, %s104
      %p113 = scmp.eq.s32.totalorder %s30, 0
      %p114 = por %p112, %p113
      %p115 = scmp.ne.s32.totalorder %s103, %s104
      %p116 = scmp.eq.s32.totalorder %s31, 1
      %p117 = por %p115, %p116
      %p119 = scmp.ne.s32.totalorder %s104, %s118
      %p120 = scmp.eq.s32.totalorder %s31, 0
      %p121 = por %p119, %p120
      %s123 = sadd.s32 %s122, 1
      %p126 = scmp.eq.s32.totalorder %s25, 1
      %p127 = scmp.ne.s32.totalorder %s122, %s124
      %p128 = scmp.eq.s32.totalorder %s25, 0
      %p129 = por %p127, %p128
      %p130 = scmp.ne.s32.totalorder %s122, %s124
      %p131 = scmp.eq.s32.totalorder %s30, 1
      %p132 = por %p130, %p131
      %p133 = scmp.ne.s32.totalorder %s124, %s125
      %p134 = scmp.eq.s32.totalorder %s30, 0
      %p135 = por %p133, %p134
      %p136 = scmp.ne.s32.totalorder %s124, %s125
      %p137 = scmp.eq.s32.totalorder %s31, 1
      %p138 = por %p136, %p137
      %p140 = scmp.ne.s32.totalorder %s125, %s139
      %p141 = scmp.eq.s32.totalorder %s31, 0
      %p142 = por %p140, %p141
      %s144 = sadd.s32 %s143, 1
      %p147 = scmp.eq.s32.totalorder %s25, 1
      %p148 = scmp.ne.s32.totalorder %s143, %s145
      %p149 = scmp.eq.s32.totalorder %s25, 0
      %p150 = por %p148, %p149
      %p151 = scmp.ne.s32.totalorder %s143, %s145
      %p152 = scmp.eq.s32.totalorder %s30, 1
      %p153 = por %p151, %p152
      %p154 = scmp.ne.s32.totalorder %s145, %s146
      %p155 = scmp.eq.s32.totalorder %s30, 0
      %p156 = por %p154, %p155
      %p157 = scmp.ne.s32.totalorder %s145, %s146
      %p158 = scmp.eq.s32.totalorder %s31, 1
      %p159 = por %p157, %p158
      %p161 = scmp.ne.s32.totalorder %s146, %s160
      %p162 = scmp.eq.s32.totalorder %s31, 0
      %p163 = por %p161, %p162
      %s165 = sadd.s32 %s164, 1
      %p168 = scmp.eq.s32.totalorder %s25, 1
      %p169 = scmp.ne.s32.totalorder %s164, %s166
      %p170 = scmp.eq.s32.totalorder %s25, 0
      %p171 = por %p169, %p170
      %p172 = scmp.ne.s32.totalorder %s164, %s166
      %p173 = scmp.eq.s32.totalorder %s30, 1
      %p174 = por %p172, %p173
      %p175 = scmp.ne.s32.totalorder %s166, %s167
      %p176 = scmp.eq.s32.totalorder %s30, 0
      %p177 = por %p175, %p176
      %p178 = scmp.ne.s32.totalorder %s166, %s167
      %p179 = scmp.eq.s32.totalorder %s31, 1
      %p180 = por %p178, %p179
      %p182 = scmp.ne.s32.totalorder %s167, %s181
      %p183 = scmp.eq.s32.totalorder %s31, 0
      %p184 = por %p182, %p183
      %s186 = sadd.s32 %s185, 1
      %p189 = scmp.eq.s32.totalorder %s25, 1
      %p190 = scmp.ne.s32.totalorder %s185, %s187
      %p191 = scmp.eq.s32.totalorder %s25, 0
      %p192 = por %p190, %p191
      %p193 = scmp.ne.s32.totalorder %s185, %s187
      %p194 = scmp.eq.s32.totalorder %s30, 1
      %p195 = por %p193, %p194
      %p196 = scmp.ne.s32.totalorder %s187, %s188
      %p197 = scmp.eq.s32.totalorder %s30, 0
      %p198 = por %p196, %p197
      %p199 = scmp.ne.s32.totalorder %s187, %s188
      %p200 = scmp.eq.s32.totalorder %s31, 1
      %p201 = por %p199, %p200
      %p203 = scmp.ne.s32.totalorder %s188, %s202
      %p204 = scmp.eq.s32.totalorder %s31, 0
      %p205 = por %p203, %p204
      %s207 = sadd.s32 %s206, 1
      %p210 = scmp.eq.s32.totalorder %s25, 1
      %p211 = scmp.ne.s32.totalorder %s206, %s208
      %p212 = scmp.eq.s32.totalorder %s25, 0
      %p213 = por %p211, %p212
      %p214 = scmp.ne.s32.totalorder %s206, %s208
      %p215 = scmp.eq.s32.totalorder %s30, 1
      %p216 = por %p214, %p215
      %p217 = scmp.ne.s32.totalorder %s208, %s209
      %p218 = scmp.eq.s32.totalorder %s30, 0
      %p219 = por %p217, %p218
      %p220 = scmp.ne.s32.totalorder %s208, %s209
      %p221 = scmp.eq.s32.totalorder %s31, 1
      %p222 = por %p220, %p221
      %p224 = scmp.ne.s32.totalorder %s209, %s223
      %p225 = scmp.eq.s32.totalorder %s31, 0
      %p226 = por %p224, %p225
      %s227 = ssub.s32 %s25, %s32
      %p228 = scmp.eq.s32.totalorder %s227, 0
      %s230 = sadd.s32 %s229, 1
      %s231 = scalar_select %p228, %s229, %s230
      %p234 = pneg %p228
      %p235 = scmp.eq.s32.totalorder %s25, 1
      %p236 = por %p234, %p235
      %p237 = scmp.ne.s32.totalorder %s229, %s232
      %p238 = scmp.eq.s32.totalorder %s25, 0
      %p239 = por %p237, %p238
      %p240 = scmp.ne.s32.totalorder %s229, %s232
      %p241 = scmp.eq.s32.totalorder %s30, 1
      %p242 = por %p240, %p241
      %p243 = scmp.ne.s32.totalorder %s232, %s233
      %p244 = scmp.eq.s32.totalorder %s30, 0
      %p245 = por %p243, %p244
      %p246 = scmp.ne.s32.totalorder %s232, %s233
      %p247 = scmp.eq.s32.totalorder %s31, 1
      %p248 = por %p246, %p247
      %p250 = scmp.ne.s32.totalorder %s233, %s249
      %p251 = scmp.eq.s32.totalorder %s31, 0
      %p252 = por %p250, %p251
      %p253 = scmp.le.s32.totalorder 1, %s25
      %p254 = scmp.lt.s32.totalorder %s25, 3
      %p255 = pnand %p253, %p254
      %p256 = pneg %p255
      // Predicated region
      $region9: #{elephantnet2_forward.1} parent=5 // pred_check
        _
      $region10: #{elephantnet2_forward.1} parent=5 // pred_check_branch
        %258 = sbr.rel (%p255) target = $region12
      $region11: #{elephantnet2_forward.1} parent=5 // pred_region
        %s259 = ssub.s32 %s25, 1
        // Predicated region
        $region13: #{elephantnet2_forward.1} parent=11 // pred_check
          %p260 = pneg %p72
        $region14: #{elephantnet2_forward.1} parent=11 // pred_check_branch
          %262 = sbr.rel (%p260) target = $region16
        $region15: #{elephantnet2_forward.1} parent=11 // pred_region
          %s264 = ssub.s32 12544, 12544
          %265 = vsyncadd [#allocation6], %s264
          %s266 = sshll.u32 [#allocation5], 4
          %s267 = int_to_ptr.vmem [resolvable:$true] %s266
          %272 = dma.hbm_to_vmem [thread:$0]  %s1, 12544, %s267, [#allocation6], 128, 128, 8
        $region16: #{elephantnet2_forward.1} parent=11 // pred_fallthru
          _
        // Predicated region
        $region17: #{elephantnet2_forward.1} parent=11 // pred_check
          %p273 = pneg %p93
        $region18: #{elephantnet2_forward.1} parent=11 // pred_check_branch
          %275 = sbr.rel (%p273) target = $region20
        $region19: #{elephantnet2_forward.1} parent=11 // pred_region
          %s277 = ssub.s32 32, 32
          %278 = vsyncadd [#allocation6], %s277
          %s280 = sshll.u32 [#allocation7], 4
          %s281 = int_to_ptr.vmem [resolvable:$true] %s280
          %283 = dma.hbm_to_vmem [thread:$0]  %s2, 32, %s281, [#allocation6]
        $region20: #{elephantnet2_forward.1} parent=11 // pred_fallthru
          _
        // Predicated region
        $region21: #{elephantnet2_forward.1} parent=11 // pred_check
          %p284 = pneg %p114
        $region22: #{elephantnet2_forward.1} parent=11 // pred_check_branch
          %286 = sbr.rel (%p284) target = $region24
        $region23: #{elephantnet2_forward.1} parent=11 // pred_region
          %s288 = ssub.s32 2048, 2048
          %289 = vsyncadd [#allocation9], %s288
          %s290 = sshll.u32 [#allocation8], 4
          %s291 = int_to_ptr.vmem [resolvable:$true] %s290
          %296 = dma.hbm_to_vmem [thread:$0]  %s3, 2048, %s291, [#allocation9], 64, 64, 4
        $region24: #{elephantnet2_forward.1} parent=11 // pred_fallthru
          _
        // Predicated region
        $region25: #{elephantnet2_forward.1} parent=11 // pred_check
          %p297 = pneg %p135
        $region26: #{elephantnet2_forward.1} parent=11 // pred_check_branch
          %299 = sbr.rel (%p297) target = $region28
        $region27: #{elephantnet2_forward.1} parent=11 // pred_region
          %s301 = ssub.s32 16, 16
          %302 = vsyncadd [#allocation9], %s301
          %s304 = sshll.u32 [#allocation10], 4
          %s305 = int_to_ptr.vmem [resolvable:$true] %s304
          %307 = dma.hbm_to_vmem [thread:$0]  %s4, 16, %s305, [#allocation9]
        $region28: #{elephantnet2_forward.1} parent=11 // pred_fallthru
          _
        // Predicated region
        $region29: #{elephantnet2_forward.1} parent=11 // pred_check
          %p308 = pneg %p156
        $region30: #{elephantnet2_forward.1} parent=11 // pred_check_branch
          %310 = sbr.rel (%p308) target = $region32
        $region31: #{elephantnet2_forward.1} parent=11 // pred_region
          %s312 = ssub.s32 1024, 1024
          %313 = vsyncadd [#allocation12], %s312
          %s314 = sshll.u32 [#allocation11], 4
          %s315 = int_to_ptr.vmem [resolvable:$true] %s314
          %320 = dma.hbm_to_vmem [thread:$0]  %s5, 1024, %s315, [#allocation12], 64, 64, 4
        $region32: #{elephantnet2_forward.1} parent=11 // pred_fallthru
          _
        // Predicated region
        $region33: #{elephantnet2_forward.1} parent=11 // pred_check
          %p321 = pneg %p177
        $region34: #{elephantnet2_forward.1} parent=11 // pred_check_branch
          %323 = sbr.rel (%p321) target = $region36
        $region35: #{elephantnet2_forward.1} parent=11 // pred_region
          %s325 = ssub.s32 16, 16
          %326 = vsyncadd [#allocation12], %s325
          %s328 = sshll.u32 [#allocation13], 4
          %s329 = int_to_ptr.vmem [resolvable:$true] %s328
          %331 = dma.hbm_to_vmem [thread:$0]  %s6, 16, %s329, [#allocation12]
        $region36: #{elephantnet2_forward.1} parent=11 // pred_fallthru
          _
        // Predicated region
        $region37: #{elephantnet2_forward.1} parent=11 // pred_check
          %p332 = pneg %p198
        $region38: #{elephantnet2_forward.1} parent=11 // pred_check_branch
          %334 = sbr.rel (%p332) target = $region40
        $region39: #{elephantnet2_forward.1} parent=11 // pred_region
          %s336 = ssub.s32 1024, 1024
          %337 = vsyncadd [#allocation15], %s336
          %s338 = sshll.u32 [#allocation14], 4
          %s339 = int_to_ptr.vmem [resolvable:$true] %s338
          %344 = dma.hbm_to_vmem [thread:$0]  %s7, 1024, %s339, [#allocation15], 64, 64, 4
        $region40: #{elephantnet2_forward.1} parent=11 // pred_fallthru
          _
        // Predicated region
        $region41: #{elephantnet2_forward.1} parent=11 // pred_check
          %p345 = pneg %p219
        $region42: #{elephantnet2_forward.1} parent=11 // pred_check_branch
          %347 = sbr.rel (%p345) target = $region44
        $region43: #{elephantnet2_forward.1} parent=11 // pred_region
          %s349 = ssub.s32 16, 16
          %350 = vsyncadd [#allocation15], %s349
          %s352 = sshll.u32 [#allocation16], 4
          %s353 = int_to_ptr.vmem [resolvable:$true] %s352
          %355 = dma.hbm_to_vmem [thread:$0]  %s8, 16, %s353, [#allocation15]
        $region44: #{elephantnet2_forward.1} parent=11 // pred_fallthru
          _
      $region12: #{elephantnet2_forward.1} parent=5 // pred_fallthru
        _
      %p356 = scmp.lt.s32.totalorder %s25, 2
      // Predicated region
      $region45: #{elephantnet2_forward.1} parent=5 // pred_check
        %p357 = pneg %p356
      $region46: #{elephantnet2_forward.1} parent=5 // pred_check_branch
        %359 = sbr.rel (%p357) target = $region48
      $region47: #{elephantnet2_forward.1} parent=5 // pred_region
        // Predicated region
        $region49: #{elephantnet2_forward.1} parent=47 // pred_check
          %p360 = pneg %p45
        $region50: #{elephantnet2_forward.1} parent=47 // pred_check_branch
          %362 = sbr.rel (%p360) target = $region52
        $region51: #{elephantnet2_forward.1} parent=47 // pred_region
          %s363 = sand.u32 %s35, 1
          %s364 = scalar_lea.sflag [#allocation3], %s363
          %s365 = sand.u32 %s35, 1
          %s366 = smul.addr %s365, 112
          %s367 = scalar_lea.vmem [#allocation2], %s366
          %s368 = smul.u32 2, %s25
          %s370 = ssub.s32 1792, 1792
          %371 = vsyncadd %s364, %s370
          %s372 = smul.addr %s368, 7
          %s373 = smul.addr %s372, 128
          %s374 = scalar_lea.hbm %s0, %s373
          %s375 = sshll.u32 %s367, 4
          %s376 = int_to_ptr.vmem [resolvable:$true] %s375
          %381 = dma.hbm_to_vmem [thread:$0]  %s374, 1792, %s376, %s364, 896, 896, 56
        $region52: #{elephantnet2_forward.1} parent=47 // pred_fallthru
          _
      $region48: #{elephantnet2_forward.1} parent=5 // pred_fallthru
        _
      %p382 = scmp.le.s32.totalorder 1, %s25
      %p383 = scmp.lt.s32.totalorder %s25, 3
      %p384 = pnand %p382, %p383
      %p385 = pneg %p384
      // Predicated region
      $region53: #{elephantnet2_forward.1} parent=5 // pred_check
        _
      $region54: #{elephantnet2_forward.1} parent=5 // pred_check_branch
        %387 = sbr.rel (%p384) target = $region56
      $region55: #{elephantnet2_forward.1} parent=5 // pred_region
        %s388 = ssub.s32 %s25, 1
        %s389 = sand.u32 %s38, 1
        %s390 = scalar_lea.sflag [#allocation3], %s389
        %s391 = sand.u32 %s38, 1
        %s392 = smul.addr %s391, 112
        %s393 = scalar_lea.vmem [#allocation2], %s392
        // Predicated region
        $region57: #{elephantnet2_forward.1} parent=55 // pred_check
          %p394 = pneg %p51
        $region58: #{elephantnet2_forward.1} parent=55 // pred_check_branch
          %396 = sbr.rel (%p394) target = $region60
        $region59: #{elephantnet2_forward.1} parent=55 // pred_region
          %397 = dma.done %s390, 1792
        $region60: #{elephantnet2_forward.1} parent=55 // pred_fallthru
          _
        // Predicated region
        $region61: #{elephantnet2_forward.1} parent=55 // pred_check
          %p398 = pneg %p72
        $region62: #{elephantnet2_forward.1} parent=55 // pred_check_branch
          %400 = sbr.rel (%p398) target = $region64
        $region63: #{elephantnet2_forward.1} parent=55 // pred_region
          %401 = dma.done [#allocation6], 12544
        $region64: #{elephantnet2_forward.1} parent=55 // pred_fallthru
          _
        // Predicated region
        $region65: #{elephantnet2_forward.1} parent=55 // pred_check
          %p402 = pneg %p93
        $region66: #{elephantnet2_forward.1} parent=55 // pred_check_branch
          %404 = sbr.rel (%p402) target = $region68
        $region67: #{elephantnet2_forward.1} parent=55 // pred_region
          %405 = dma.done [#allocation6], 32
        $region68: #{elephantnet2_forward.1} parent=55 // pred_fallthru
          _
        // Predicated region
        $region69: #{elephantnet2_forward.1} parent=55 // pred_check
          %p406 = pneg %p114
        $region70: #{elephantnet2_forward.1} parent=55 // pred_check_branch
          %408 = sbr.rel (%p406) target = $region72
        $region71: #{elephantnet2_forward.1} parent=55 // pred_region
          %409 = dma.done [#allocation9], 2048
        $region72: #{elephantnet2_forward.1} parent=55 // pred_fallthru
          _
        // Predicated region
        $region73: #{elephantnet2_forward.1} parent=55 // pred_check
          %p410 = pneg %p135
        $region74: #{elephantnet2_forward.1} parent=55 // pred_check_branch
          %412 = sbr.rel (%p410) target = $region76
        $region75: #{elephantnet2_forward.1} parent=55 // pred_region
          %413 = dma.done [#allocation9], 16
        $region76: #{elephantnet2_forward.1} parent=55 // pred_fallthru
          _
        // Predicated region
        $region77: #{elephantnet2_forward.1} parent=55 // pred_check
          %p414 = pneg %p156
        $region78: #{elephantnet2_forward.1} parent=55 // pred_check_branch
          %416 = sbr.rel (%p414) target = $region80
        $region79: #{elephantnet2_forward.1} parent=55 // pred_region
          %417 = dma.done [#allocation12], 1024
        $region80: #{elephantnet2_forward.1} parent=55 // pred_fallthru
          _
        // Predicated region
        $region81: #{elephantnet2_forward.1} parent=55 // pred_check
          %p418 = pneg %p177
        $region82: #{elephantnet2_forward.1} parent=55 // pred_check_branch
          %420 = sbr.rel (%p418) target = $region84
        $region83: #{elephantnet2_forward.1} parent=55 // pred_region
          %421 = dma.done [#allocation12], 16
        $region84: #{elephantnet2_forward.1} parent=55 // pred_fallthru
          _
        // Predicated region
        $region85: #{elephantnet2_forward.1} parent=55 // pred_check
          %p422 = pneg %p198
        $region86: #{elephantnet2_forward.1} parent=55 // pred_check_branch
          %424 = sbr.rel (%p422) target = $region88
        $region87: #{elephantnet2_forward.1} parent=55 // pred_region
          %425 = dma.done [#allocation15], 1024
        $region88: #{elephantnet2_forward.1} parent=55 // pred_fallthru
          _
        // Predicated region
        $region89: #{elephantnet2_forward.1} parent=55 // pred_check
          %p426 = pneg %p219
        $region90: #{elephantnet2_forward.1} parent=55 // pred_check_branch
          %428 = sbr.rel (%p426) target = $region92
        $region91: #{elephantnet2_forward.1} parent=55 // pred_region
          %429 = dma.done [#allocation15], 16
        $region92: #{elephantnet2_forward.1} parent=55 // pred_fallthru
          _
        %s430 = sand.u32 %s38, 1
        %s431 = scalar_lea.sflag [#allocation3], %s430
        %s432 = sand.u32 %s38, 1
        %s433 = smul.addr %s432, 112
        %s434 = scalar_lea.vmem [#allocation2], %s433
        %p435 = pneg %p51
        %p436 = pneg %p48
        %p437 = pneg %p72
        %p438 = pneg %p69
        %p439 = pneg %p93
        %p440 = pneg %p90
        %p441 = pneg %p114
        %p442 = pneg %p111
        %p443 = pneg %p135
        %p444 = pneg %p132
        %p445 = pneg %p156
        %p446 = pneg %p153
        %p447 = pneg %p177
        %p448 = pneg %p174
        %p449 = pneg %p198
        %p450 = pneg %p195
        %p451 = pneg %p219
        %p452 = pneg %p216
        %p453 = pneg %p245
        %p454 = pneg %p242
        %s455 = sand.u32 %s232, 1
        %s456 = scalar_lea.sflag [#allocation4], %s455
        %s457 = sand.u32 %s232, 1
        %s458 = smul.addr %s457, 16
        %s459 = scalar_lea.vmem [#allocation17], %s458
        %s460 = smul.u32 2, %s30
        %s461 = smul.u32 2, %s30
        %v463 = vld [vmem:[%s393] sm:$0xff]
        %v464 = vld [vmem:[%s393 + $0x8] sm:$0xff]
        %v465 = vld [vmem:[%s393 + $0x10] sm:$0xff]
        %v466 = vld [vmem:[%s393 + $0x18] sm:$0xff]
        %v467 = vld [vmem:[%s393 + $0x20] sm:$0xff]
        %v468 = vld [vmem:[%s393 + $0x28] sm:$0xff]
        %v469 = vld [vmem:[%s393 + $0x30] sm:$0xff]
        %v470 = vld [vmem:[%s393 + $0x38] sm:$0xff]
        %v471 = vld [vmem:[%s393 + $0x40] sm:$0xff]
        %v472 = vld [vmem:[%s393 + $0x48] sm:$0xff]
        %v473 = vld [vmem:[%s393 + $0x50] sm:$0xff]
        %v474 = vld [vmem:[%s393 + $0x58] sm:$0xff]
        %v475 = vld [vmem:[%s393 + $0x60] sm:$0xff]
        %v476 = vld [vmem:[%s393 + $0x68] sm:$0xff]
        %v477 = vpack.c.bf16 %v470, %v463
        %v478 = vpack.c.bf16 %v471, %v464
        %v479 = vpack.c.bf16 %v472, %v465
        %v480 = vpack.c.bf16 %v473, %v466
        %v481 = vpack.c.bf16 %v474, %v467
        %v482 = vpack.c.bf16 %v475, %v468
        %v483 = vpack.c.bf16 %v476, %v469
        %v484 = vld [vmem:[#allocation5] sm:$0xff]
        %v485 = vld [vmem:[#allocation5 + $0x8] sm:$0xff]
        %v486 = vld [vmem:[#allocation5 + $0x10] sm:$0xff]
        %v487 = vld [vmem:[#allocation5 + $0x18] sm:$0xff]
        %v488 = vld [vmem:[#allocation5 + $0x20] sm:$0xff]
        %v489 = vld [vmem:[#allocation5 + $0x28] sm:$0xff]
        %v490 = vld [vmem:[#allocation5 + $0x30] sm:$0xff]
        %v491 = vld [vmem:[#allocation5 + $0x38] sm:$0xff]
        %v492 = vld [vmem:[#allocation5 + $0x40] sm:$0xff]
        %v493 = vld [vmem:[#allocation5 + $0x48] sm:$0xff]
        %v494 = vld [vmem:[#allocation5 + $0x50] sm:$0xff]
        %v495 = vld [vmem:[#allocation5 + $0x58] sm:$0xff]
        %v496 = vld [vmem:[#allocation5 + $0x60] sm:$0xff]
        %v497 = vld [vmem:[#allocation5 + $0x68] sm:$0xff]
        %v498 = vld [vmem:[#allocation5 + $0x70] sm:$0xff]
        %v499 = vld [vmem:[#allocation5 + $0x78] sm:$0xff]
        %v500 = vld [vmem:[#allocation5 + $0x80] sm:$0xff]
        %v501 = vld [vmem:[#allocation5 + $0x88] sm:$0xff]
        %v502 = vld [vmem:[#allocation5 + $0x90] sm:$0xff]
        %v503 = vld [vmem:[#allocation5 + $0x98] sm:$0xff]
        %v504 = vld [vmem:[#allocation5 + $0xa0] sm:$0xff]
        %v505 = vld [vmem:[#allocation5 + $0xa8] sm:$0xff]
        %v506 = vld [vmem:[#allocation5 + $0xb0] sm:$0xff]
        %v507 = vld [vmem:[#allocation5 + $0xb8] sm:$0xff]
        %v508 = vld [vmem:[#allocation5 + $0xc0] sm:$0xff]
        %v509 = vld [vmem:[#allocation5 + $0xc8] sm:$0xff]
        %v510 = vld [vmem:[#allocation5 + $0xd0] sm:$0xff]
        %v511 = vld [vmem:[#allocation5 + $0xd8] sm:$0xff]
        %v512 = vld [vmem:[#allocation5 + $0xe0] sm:$0xff]
        %v513 = vld [vmem:[#allocation5 + $0xe8] sm:$0xff]
        %v514 = vld [vmem:[#allocation5 + $0xf0] sm:$0xff]
        %v515 = vld [vmem:[#allocation5 + $0xf8] sm:$0xff]
        %v516 = vld [vmem:[#allocation5 + $0x100] sm:$0xff]
        %v517 = vld [vmem:[#allocation5 + $0x108] sm:$0xff]
        %v518 = vld [vmem:[#allocation5 + $0x110] sm:$0xff]
        %v519 = vld [vmem:[#allocation5 + $0x118] sm:$0xff]
        %v520 = vld [vmem:[#allocation5 + $0x120] sm:$0xff]
        %v521 = vld [vmem:[#allocation5 + $0x128] sm:$0xff]
        %v522 = vld [vmem:[#allocation5 + $0x130] sm:$0xff]
        %v523 = vld [vmem:[#allocation5 + $0x138] sm:$0xff]
        %v524 = vld [vmem:[#allocation5 + $0x140] sm:$0xff]
        %v525 = vld [vmem:[#allocation5 + $0x148] sm:$0xff]
        %v526 = vld [vmem:[#allocation5 + $0x150] sm:$0xff]
        %v527 = vld [vmem:[#allocation5 + $0x158] sm:$0xff]
        %v528 = vld [vmem:[#allocation5 + $0x160] sm:$0xff]
        %v529 = vld [vmem:[#allocation5 + $0x168] sm:$0xff]
        %v530 = vld [vmem:[#allocation5 + $0x170] sm:$0xff]
        %v531 = vld [vmem:[#allocation5 + $0x178] sm:$0xff]
        %v532 = vld [vmem:[#allocation5 + $0x180] sm:$0xff]
        %v533 = vld [vmem:[#allocation5 + $0x188] sm:$0xff]
        %v534 = vld [vmem:[#allocation5 + $0x190] sm:$0xff]
        %v535 = vld [vmem:[#allocation5 + $0x198] sm:$0xff]
        %v536 = vld [vmem:[#allocation5 + $0x1a0] sm:$0xff]
        %v537 = vld [vmem:[#allocation5 + $0x1a8] sm:$0xff]
        %v538 = vld [vmem:[#allocation5 + $0x1b0] sm:$0xff]
        %v539 = vld [vmem:[#allocation5 + $0x1b8] sm:$0xff]
        %v540 = vld [vmem:[#allocation5 + $0x1c0] sm:$0xff]
        %v541 = vld [vmem:[#allocation5 + $0x1c8] sm:$0xff]
        %v542 = vld [vmem:[#allocation5 + $0x1d0] sm:$0xff]
        %v543 = vld [vmem:[#allocation5 + $0x1d8] sm:$0xff]
        %v544 = vld [vmem:[#allocation5 + $0x1e0] sm:$0xff]
        %v545 = vld [vmem:[#allocation5 + $0x1e8] sm:$0xff]
        %v546 = vld [vmem:[#allocation5 + $0x1f0] sm:$0xff]
        %v547 = vld [vmem:[#allocation5 + $0x1f8] sm:$0xff]
        %v548 = vld [vmem:[#allocation5 + $0x200] sm:$0xff]
        %v549 = vld [vmem:[#allocation5 + $0x208] sm:$0xff]
        %v550 = vld [vmem:[#allocation5 + $0x210] sm:$0xff]
        %v551 = vld [vmem:[#allocation5 + $0x218] sm:$0xff]
        %v552 = vld [vmem:[#allocation5 + $0x220] sm:$0xff]
        %v553 = vld [vmem:[#allocation5 + $0x228] sm:$0xff]
        %v554 = vld [vmem:[#allocation5 + $0x230] sm:$0xff]
        %v555 = vld [vmem:[#allocation5 + $0x238] sm:$0xff]
        %v556 = vld [vmem:[#allocation5 + $0x240] sm:$0xff]
        %v557 = vld [vmem:[#allocation5 + $0x248] sm:$0xff]
        %v558 = vld [vmem:[#allocation5 + $0x250] sm:$0xff]
        %v559 = vld [vmem:[#allocation5 + $0x258] sm:$0xff]
        %v560 = vld [vmem:[#allocation5 + $0x260] sm:$0xff]
        %v561 = vld [vmem:[#allocation5 + $0x268] sm:$0xff]
        %v562 = vld [vmem:[#allocation5 + $0x270] sm:$0xff]
        %v563 = vld [vmem:[#allocation5 + $0x278] sm:$0xff]
        %v564 = vld [vmem:[#allocation5 + $0x280] sm:$0xff]
        %v565 = vld [vmem:[#allocation5 + $0x288] sm:$0xff]
        %v566 = vld [vmem:[#allocation5 + $0x290] sm:$0xff]
        %v567 = vld [vmem:[#allocation5 + $0x298] sm:$0xff]
        %v568 = vld [vmem:[#allocation5 + $0x2a0] sm:$0xff]
        %v569 = vld [vmem:[#allocation5 + $0x2a8] sm:$0xff]
        %v570 = vld [vmem:[#allocation5 + $0x2b0] sm:$0xff]
        %v571 = vld [vmem:[#allocation5 + $0x2b8] sm:$0xff]
        %v572 = vld [vmem:[#allocation5 + $0x2c0] sm:$0xff]
        %v573 = vld [vmem:[#allocation5 + $0x2c8] sm:$0xff]
        %v574 = vld [vmem:[#allocation5 + $0x2d0] sm:$0xff]
        %v575 = vld [vmem:[#allocation5 + $0x2d8] sm:$0xff]
        %v576 = vld [vmem:[#allocation5 + $0x2e0] sm:$0xff]
        %v577 = vld [vmem:[#allocation5 + $0x2e8] sm:$0xff]
        %v578 = vld [vmem:[#allocation5 + $0x2f0] sm:$0xff]
        %v579 = vld [vmem:[#allocation5 + $0x2f8] sm:$0xff]
        %v580 = vld [vmem:[#allocation5 + $0x300] sm:$0xff]
        %v581 = vld [vmem:[#allocation5 + $0x308] sm:$0xff]
        %v582 = vld [vmem:[#allocation7] sm:$0x3]
        %v584 = vlaneseq
        %v585 = vshrl.u32 %v584, 7
        %v586 = vsub.s32 0, %v585
        %v587 = vrot.slane %v582, %v586
        %v588 = vlaneseq
        %v589 = vshrl.u32 %v588, 7
        %v590 = vsub.s32 1, %v589
        %v591 = vrot.slane %v582, %v590
        %v692 = vunpack.c.l.b16 %v484
        %v693 = vunpack.c.h.b16 %v484
        %v694 = vunpack.c.l.b16 %v485
        %v695 = vunpack.c.h.b16 %v485
        %v696 = vunpack.c.l.b16 %v486
        %v697 = vunpack.c.h.b16 %v486
        %v698 = vunpack.c.l.b16 %v487
        %v699 = vunpack.c.h.b16 %v487
        %v700 = vunpack.c.l.b16 %v488
        %v701 = vunpack.c.h.b16 %v488
        %v702 = vunpack.c.l.b16 %v489
        %v703 = vunpack.c.h.b16 %v489
        %v704 = vunpack.c.l.b16 %v490
        %v705 = vunpack.c.h.b16 %v490
        %v706 = vunpack.c.l.b16 %v491
        %v707 = vunpack.c.h.b16 %v491
        %v708 = vunpack.c.l.b16 %v492
        %v709 = vunpack.c.h.b16 %v492
        %v710 = vunpack.c.l.b16 %v493
        %v711 = vunpack.c.h.b16 %v493
        %v712 = vunpack.c.l.b16 %v494
        %v713 = vunpack.c.h.b16 %v494
        %v714 = vunpack.c.l.b16 %v495
        %v715 = vunpack.c.h.b16 %v495
        %v716 = vunpack.c.l.b16 %v496
        %v717 = vunpack.c.h.b16 %v496
        %v718 = vunpack.c.l.b16 %v497
        %v719 = vunpack.c.h.b16 %v497
        %v720 = vunpack.c.l.b16 %v498
        %v721 = vunpack.c.h.b16 %v498
        %v722 = vunpack.c.l.b16 %v499
        %v723 = vunpack.c.h.b16 %v499
        %v724 = vunpack.c.l.b16 %v500
        %v725 = vunpack.c.h.b16 %v500
        %v726 = vunpack.c.l.b16 %v501
        %v727 = vunpack.c.h.b16 %v501
        %v728 = vunpack.c.l.b16 %v502
        %v729 = vunpack.c.h.b16 %v502
        %v730 = vunpack.c.l.b16 %v503
        %v731 = vunpack.c.h.b16 %v503
        %v732 = vunpack.c.l.b16 %v504
        %v733 = vunpack.c.h.b16 %v504
        %v734 = vunpack.c.l.b16 %v505
        %v735 = vunpack.c.h.b16 %v505
        %v736 = vunpack.c.l.b16 %v506
        %v737 = vunpack.c.h.b16 %v506
        %v738 = vunpack.c.l.b16 %v507
        %v739 = vunpack.c.h.b16 %v507
        %v740 = vunpack.c.l.b16 %v508
        %v741 = vunpack.c.h.b16 %v508
        %v742 = vunpack.c.l.b16 %v509
        %v743 = vunpack.c.h.b16 %v509
        %v744 = vunpack.c.l.b16 %v510
        %v745 = vunpack.c.h.b16 %v510
        %v746 = vunpack.c.l.b16 %v511
        %v747 = vunpack.c.h.b16 %v511
        %v748 = vunpack.c.l.b16 %v512
        %v749 = vunpack.c.h.b16 %v512
        %v750 = vunpack.c.l.b16 %v513
        %v751 = vunpack.c.h.b16 %v513
        %v752 = vunpack.c.l.b16 %v514
        %v753 = vunpack.c.h.b16 %v514
        %v754 = vunpack.c.l.b16 %v515
        %v755 = vunpack.c.h.b16 %v515
        %v756 = vunpack.c.l.b16 %v516
        %v757 = vunpack.c.h.b16 %v516
        %v758 = vunpack.c.l.b16 %v517
        %v759 = vunpack.c.h.b16 %v517
        %v760 = vunpack.c.l.b16 %v518
        %v761 = vunpack.c.h.b16 %v518
        %v762 = vunpack.c.l.b16 %v519
        %v763 = vunpack.c.h.b16 %v519
        %v764 = vunpack.c.l.b16 %v520
        %v765 = vunpack.c.h.b16 %v520
        %v766 = vunpack.c.l.b16 %v521
        %v767 = vunpack.c.h.b16 %v521
        %v768 = vunpack.c.l.b16 %v522
        %v769 = vunpack.c.h.b16 %v522
        %v770 = vunpack.c.l.b16 %v523
        %v771 = vunpack.c.h.b16 %v523
        %v772 = vunpack.c.l.b16 %v524
        %v773 = vunpack.c.h.b16 %v524
        %v774 = vunpack.c.l.b16 %v525
        %v775 = vunpack.c.h.b16 %v525
        %v776 = vunpack.c.l.b16 %v526
        %v777 = vunpack.c.h.b16 %v526
        %v778 = vunpack.c.l.b16 %v527
        %v779 = vunpack.c.h.b16 %v527
        %v780 = vunpack.c.l.b16 %v528
        %v781 = vunpack.c.h.b16 %v528
        %v782 = vunpack.c.l.b16 %v529
        %v783 = vunpack.c.h.b16 %v529
        %v784 = vunpack.c.l.b16 %v530
        %v785 = vunpack.c.h.b16 %v530
        %v786 = vunpack.c.l.b16 %v531
        %v787 = vunpack.c.h.b16 %v531
        %v788 = vunpack.c.l.b16 %v532
        %v789 = vunpack.c.h.b16 %v532
        %v790 = vunpack.c.l.b16 %v533
        %v791 = vunpack.c.h.b16 %v533
        %v792 = vunpack.c.l.b16 %v534
        %v793 = vunpack.c.h.b16 %v534
        %v794 = vunpack.c.l.b16 %v535
        %v795 = vunpack.c.h.b16 %v535
        %v796 = vunpack.c.l.b16 %v536
        %v797 = vunpack.c.h.b16 %v536
        %v798 = vunpack.c.l.b16 %v537
        %v799 = vunpack.c.h.b16 %v537
        %v800 = vunpack.c.l.b16 %v538
        %v801 = vunpack.c.h.b16 %v538
        %v802 = vunpack.c.l.b16 %v539
        %v803 = vunpack.c.h.b16 %v539
        %v804 = vunpack.c.l.b16 %v540
        %v805 = vunpack.c.h.b16 %v540
        %v806 = vunpack.c.l.b16 %v541
        %v807 = vunpack.c.h.b16 %v541
        %v808 = vunpack.c.l.b16 %v542
        %v809 = vunpack.c.h.b16 %v542
        %v810 = vunpack.c.l.b16 %v543
        %v811 = vunpack.c.h.b16 %v543
        %v812 = vunpack.c.l.b16 %v544
        %v813 = vunpack.c.h.b16 %v544
        %v814 = vunpack.c.l.b16 %v545
        %v815 = vunpack.c.h.b16 %v545
        %v816 = vunpack.c.l.b16 %v546
        %v817 = vunpack.c.h.b16 %v546
        %v818 = vunpack.c.l.b16 %v547
        %v819 = vunpack.c.h.b16 %v547
        %v820 = vunpack.c.l.b16 %v548
        %v821 = vunpack.c.h.b16 %v548
        %v822 = vunpack.c.l.b16 %v549
        %v823 = vunpack.c.h.b16 %v549
        %v824 = vunpack.c.l.b16 %v550
        %v825 = vunpack.c.h.b16 %v550
        %v826 = vunpack.c.l.b16 %v551
        %v827 = vunpack.c.h.b16 %v551
        %v828 = vunpack.c.l.b16 %v552
        %v829 = vunpack.c.h.b16 %v552
        %v830 = vunpack.c.l.b16 %v553
        %v831 = vunpack.c.h.b16 %v553
        %v832 = vunpack.c.l.b16 %v554
        %v833 = vunpack.c.h.b16 %v554
        %v834 = vunpack.c.l.b16 %v555
        %v835 = vunpack.c.h.b16 %v555
        %v836 = vunpack.c.l.b16 %v556
        %v837 = vunpack.c.h.b16 %v556
        %v838 = vunpack.c.l.b16 %v557
        %v839 = vunpack.c.h.b16 %v557
        %v840 = vunpack.c.l.b16 %v558
        %v841 = vunpack.c.h.b16 %v558
        %v842 = vunpack.c.l.b16 %v559
        %v843 = vunpack.c.h.b16 %v559
        %v844 = vunpack.c.l.b16 %v560
        %v845 = vunpack.c.h.b16 %v560
        %v846 = vunpack.c.l.b16 %v561
        %v847 = vunpack.c.h.b16 %v561
        %v848 = vunpack.c.l.b16 %v562
        %v849 = vunpack.c.h.b16 %v562
        %v850 = vunpack.c.l.b16 %v563
        %v851 = vunpack.c.h.b16 %v563
        %v852 = vunpack.c.l.b16 %v564
        %v853 = vunpack.c.h.b16 %v564
        %v854 = vunpack.c.l.b16 %v565
        %v855 = vunpack.c.h.b16 %v565
        %v856 = vunpack.c.l.b16 %v566
        %v857 = vunpack.c.h.b16 %v566
        %v858 = vunpack.c.l.b16 %v567
        %v859 = vunpack.c.h.b16 %v567
        %v860 = vunpack.c.l.b16 %v568
        %v861 = vunpack.c.h.b16 %v568
        %v862 = vunpack.c.l.b16 %v569
        %v863 = vunpack.c.h.b16 %v569
        %v864 = vunpack.c.l.b16 %v570
        %v865 = vunpack.c.h.b16 %v570
        %v866 = vunpack.c.l.b16 %v571
        %v867 = vunpack.c.h.b16 %v571
        %v868 = vunpack.c.l.b16 %v572
        %v869 = vunpack.c.h.b16 %v572
        %v870 = vunpack.c.l.b16 %v573
        %v871 = vunpack.c.h.b16 %v573
        %v872 = vunpack.c.l.b16 %v574
        %v873 = vunpack.c.h.b16 %v574
        %v874 = vunpack.c.l.b16 %v575
        %v875 = vunpack.c.h.b16 %v575
        %v876 = vunpack.c.l.b16 %v576
        %v877 = vunpack.c.h.b16 %v576
        %v878 = vunpack.c.l.b16 %v577
        %v879 = vunpack.c.h.b16 %v577
        %v880 = vunpack.c.l.b16 %v578
        %v881 = vunpack.c.h.b16 %v578
        %v882 = vunpack.c.l.b16 %v579
        %v883 = vunpack.c.h.b16 %v579
        %v884 = vunpack.c.l.b16 %v580
        %v885 = vunpack.c.h.b16 %v580
        %v886 = vunpack.c.l.b16 %v581
        %v887 = vunpack.c.h.b16 %v581
        %v888 = vpack.c.b16 %v694, %v692
        %v889 = vpack.c.b16 %v695, %v693
        %v890 = vpack.c.b16 %v698, %v696
        %v891 = vpack.c.b16 %v699, %v697
        %v892 = vpack.c.b16 %v702, %v700
        %v893 = vpack.c.b16 %v703, %v701
        %v894 = vpack.c.b16 %v706, %v704
        %v895 = vpack.c.b16 %v707, %v705
        %v896 = vpack.c.b16 %v710, %v708
        %v897 = vpack.c.b16 %v711, %v709
        %v898 = vpack.c.b16 %v714, %v712
        %v899 = vpack.c.b16 %v715, %v713
        %v900 = vpack.c.b16 %v718, %v716
        %v901 = vpack.c.b16 %v719, %v717
        %v902 = vpack.c.b16 %v722, %v720
        %v903 = vpack.c.b16 %v723, %v721
        %v904 = vpack.c.b16 %v726, %v724
        %v905 = vpack.c.b16 %v727, %v725
        %v906 = vpack.c.b16 %v730, %v728
        %v907 = vpack.c.b16 %v731, %v729
        %v908 = vpack.c.b16 %v734, %v732
        %v909 = vpack.c.b16 %v735, %v733
        %v910 = vpack.c.b16 %v738, %v736
        %v911 = vpack.c.b16 %v739, %v737
        %v912 = vpack.c.b16 %v742, %v740
        %v913 = vpack.c.b16 %v743, %v741
        %v914 = vpack.c.b16 %v746, %v744
        %v915 = vpack.c.b16 %v747, %v745
        %v916 = vpack.c.b16 %v750, %v748
        %v917 = vpack.c.b16 %v751, %v749
        %v918 = vpack.c.b16 %v754, %v752
        %v919 = vpack.c.b16 %v755, %v753
        %v920 = vpack.c.b16 %v758, %v756
        %v921 = vpack.c.b16 %v759, %v757
        %v922 = vpack.c.b16 %v762, %v760
        %v923 = vpack.c.b16 %v763, %v761
        %v924 = vpack.c.b16 %v766, %v764
        %v925 = vpack.c.b16 %v767, %v765
        %v926 = vpack.c.b16 %v770, %v768
        %v927 = vpack.c.b16 %v771, %v769
        %v928 = vpack.c.b16 %v774, %v772
        %v929 = vpack.c.b16 %v775, %v773
        %v930 = vpack.c.b16 %v778, %v776
        %v931 = vpack.c.b16 %v779, %v777
        %v932 = vpack.c.b16 %v782, %v780
        %v933 = vpack.c.b16 %v783, %v781
        %v934 = vpack.c.b16 %v786, %v784
        %v935 = vpack.c.b16 %v787, %v785
        %v936 = vpack.c.b16 %v790, %v788
        %v937 = vpack.c.b16 %v791, %v789
        %v938 = vpack.c.b16 %v794, %v792
        %v939 = vpack.c.b16 %v795, %v793
        %v940 = vpack.c.b16 %v798, %v796
        %v941 = vpack.c.b16 %v799, %v797
        %v942 = vpack.c.b16 %v802, %v800
        %v943 = vpack.c.b16 %v803, %v801
        %v944 = vpack.c.b16 %v806, %v804
        %v945 = vpack.c.b16 %v807, %v805
        %v946 = vpack.c.b16 %v810, %v808
        %v947 = vpack.c.b16 %v811, %v809
        %v948 = vpack.c.b16 %v814, %v812
        %v949 = vpack.c.b16 %v815, %v813
        %v950 = vpack.c.b16 %v818, %v816
        %v951 = vpack.c.b16 %v819, %v817
        %v952 = vpack.c.b16 %v822, %v820
        %v953 = vpack.c.b16 %v823, %v821
        %v954 = vpack.c.b16 %v826, %v824
        %v955 = vpack.c.b16 %v827, %v825
        %v956 = vpack.c.b16 %v830, %v828
        %v957 = vpack.c.b16 %v831, %v829
        %v958 = vpack.c.b16 %v834, %v832
        %v959 = vpack.c.b16 %v835, %v833
        %v960 = vpack.c.b16 %v838, %v836
        %v961 = vpack.c.b16 %v839, %v837
        %v962 = vpack.c.b16 %v842, %v840
        %v963 = vpack.c.b16 %v843, %v841
        %v964 = vpack.c.b16 %v846, %v844
        %v965 = vpack.c.b16 %v847, %v845
        %v966 = vpack.c.b16 %v850, %v848
        %v967 = vpack.c.b16 %v851, %v849
        %v968 = vpack.c.b16 %v854, %v852
        %v969 = vpack.c.b16 %v855, %v853
        %v970 = vpack.c.b16 %v858, %v856
        %v971 = vpack.c.b16 %v859, %v857
        %v972 = vpack.c.b16 %v862, %v860
        %v973 = vpack.c.b16 %v863, %v861
        %v974 = vpack.c.b16 %v866, %v864
        %v975 = vpack.c.b16 %v867, %v865
        %v976 = vpack.c.b16 %v870, %v868
        %v977 = vpack.c.b16 %v871, %v869
        %v978 = vpack.c.b16 %v874, %v872
        %v979 = vpack.c.b16 %v875, %v873
        %v980 = vpack.c.b16 %v878, %v876
        %v981 = vpack.c.b16 %v879, %v877
        %v982 = vpack.c.b16 %v882, %v880
        %v983 = vpack.c.b16 %v883, %v881
        %v984 = vpack.c.b16 %v886, %v884
        %v985 = vpack.c.b16 %v887, %v885
        %vm1084 = vcmask 130048
        %v1086 = vsel %vm1084, %v483, 0
        %1088 = vmatprep.subr.bf16.mxu0 %v889
        %1089 = vmatpush1.bf16.msra.mxu0 %v888
        %1090 = vmatprep.subr.bf16.mxu0 %v891
        %1091 = vmatpush1.bf16.msra.mxu0 %v890
        %1092 = vmatprep.subr.bf16.mxu0 %v893
        %1093 = vmatpush1.bf16.msra.mxu0 %v892
        %1094 = vmatprep.subr.bf16.mxu0 %v895
        %1095 = vmatpush1.bf16.msra.mxu0 %v894
        %1096 = vmatprep.subr.bf16.mxu0 %v897
        %1097 = vmatpush1.bf16.msra.mxu0 %v896
        %1098 = vmatprep.subr.bf16.mxu0 %v899
        %1099 = vmatpush1.bf16.msra.mxu0 %v898
        %1100 = vmatprep.subr.bf16.mxu0 %v901
        %1101 = vmatpush1.bf16.msra.mxu0 %v900
        %1102 = vmatprep.subr.bf16.mxu0 %v903
        %1103 = vmatpush1.bf16.msra.mxu0 %v902
        %1104 = vmatprep.subr.bf16.mxu0 %v905
        %1105 = vmatpush1.bf16.msra.mxu0 %v904
        %1106 = vmatprep.subr.bf16.mxu0 %v907
        %1107 = vmatpush1.bf16.msra.mxu0 %v906
        %1108 = vmatprep.subr.bf16.mxu0 %v909
        %1109 = vmatpush1.bf16.msra.mxu0 %v908
        %1110 = vmatprep.subr.bf16.mxu0 %v911
        %1111 = vmatpush1.bf16.msra.mxu0 %v910
        %1112 = vmatprep.subr.bf16.mxu0 %v913
        %1113 = vmatpush1.bf16.msra.mxu0 %v912
        %1114 = vmatprep.subr.bf16.mxu0 %v915
        %1115 = vmatpush1.bf16.msra.mxu0 %v914
        %1116 = vmatprep.subr.bf16.mxu0 %v917
        %1117 = vmatpush1.bf16.msra.mxu0 %v916
        %1118 = vmatprep.subr.bf16.mxu0 %v919
        %1119 = vmatpush1.bf16.msra.mxu0 %v918
        %1120 = vmatprep.mubr.bf16.mxu0 %v478
        %1121 = vmatmul.mubr.bf16.gmra.mrb[0].mxu0 %v477
        %v1122 = vpop.f32.mrb[0].mxu0
        %v1123 = vadd.f32 %v587, %v1122
        %v1124 = vpop.f32.mrb[0].mxu0
        %v1125 = vadd.f32 %v591, %v1124
        %v1126 = vpop.f32.mrb[0].mxu0
        %v1127 = vadd.f32 %v587, %v1126
        %v1128 = vpop.f32.mrb[0].mxu0
        %v1129 = vadd.f32 %v591, %v1128
        %1130 = vdwg.mxu0
        %1131 = vmatprep.subr.bf16.mxu0 %v921
        %1132 = vmatpush1.bf16.msra.mxu0 %v920
        %1133 = vmatprep.subr.bf16.mxu0 %v923
        %1134 = vmatpush1.bf16.msra.mxu0 %v922
        %1135 = vmatprep.subr.bf16.mxu0 %v925
        %1136 = vmatpush1.bf16.msra.mxu0 %v924
        %1137 = vmatprep.subr.bf16.mxu0 %v927
        %1138 = vmatpush1.bf16.msra.mxu0 %v926
        %1139 = vmatprep.subr.bf16.mxu0 %v929
        %1140 = vmatpush1.bf16.msra.mxu0 %v928
        %1141 = vmatprep.subr.bf16.mxu0 %v931
        %1142 = vmatpush1.bf16.msra.mxu0 %v930
        %1143 = vmatprep.subr.bf16.mxu0 %v933
        %1144 = vmatpush1.bf16.msra.mxu0 %v932
        %1145 = vmatprep.subr.bf16.mxu0 %v935
        %1146 = vmatpush1.bf16.msra.mxu0 %v934
        %1147 = vmatprep.subr.bf16.mxu0 %v937
        %1148 = vmatpush1.bf16.msra.mxu0 %v936
        %1149 = vmatprep.subr.bf16.mxu0 %v939
        %1150 = vmatpush1.bf16.msra.mxu0 %v938
        %1151 = vmatprep.subr.bf16.mxu0 %v941
        %1152 = vmatpush1.bf16.msra.mxu0 %v940
        %1153 = vmatprep.subr.bf16.mxu0 %v943
        %1154 = vmatpush1.bf16.msra.mxu0 %v942
        %1155 = vmatprep.subr.bf16.mxu0 %v945
        %1156 = vmatpush1.bf16.msra.mxu0 %v944
        %1157 = vmatprep.subr.bf16.mxu0 %v947
        %1158 = vmatpush1.bf16.msra.mxu0 %v946
        %1159 = vmatprep.subr.bf16.mxu0 %v949
        %1160 = vmatpush1.bf16.msra.mxu0 %v948
        %1161 = vmatprep.subr.bf16.mxu0 %v951
        %1162 = vmatpush1.bf16.msra.mxu0 %v950
        %1163 = vmatprep.mubr.bf16.mxu0 %v480
        %1164 = vmatmul.mubr.bf16.gmra.mrb[0].mxu0 %v479
        %v1165 = vpop.f32.mrb[0].mxu0
        %v1166 = vadd.f32 %v1123, %v1165
        %v1167 = vpop.f32.mrb[0].mxu0
        %v1168 = vadd.f32 %v1125, %v1167
        %v1169 = vpop.f32.mrb[0].mxu0
        %v1170 = vadd.f32 %v1127, %v1169
        %v1171 = vpop.f32.mrb[0].mxu0
        %v1172 = vadd.f32 %v1129, %v1171
        %1173 = vdwg.mxu0
        %1174 = vmatprep.subr.bf16.mxu0 %v953
        %1175 = vmatpush1.bf16.msra.mxu0 %v952
        %1176 = vmatprep.subr.bf16.mxu0 %v955
        %1177 = vmatpush1.bf16.msra.mxu0 %v954
        %1178 = vmatprep.subr.bf16.mxu0 %v957
        %1179 = vmatpush1.bf16.msra.mxu0 %v956
        %1180 = vmatprep.subr.bf16.mxu0 %v959
        %1181 = vmatpush1.bf16.msra.mxu0 %v958
        %1182 = vmatprep.subr.bf16.mxu0 %v961
        %1183 = vmatpush1.bf16.msra.mxu0 %v960
        %1184 = vmatprep.subr.bf16.mxu0 %v963
        %1185 = vmatpush1.bf16.msra.mxu0 %v962
        %1186 = vmatprep.subr.bf16.mxu0 %v965
        %1187 = vmatpush1.bf16.msra.mxu0 %v964
        %1188 = vmatprep.subr.bf16.mxu0 %v967
        %1189 = vmatpush1.bf16.msra.mxu0 %v966
        %1190 = vmatprep.subr.bf16.mxu0 %v969
        %1191 = vmatpush1.bf16.msra.mxu0 %v968
        %1192 = vmatprep.subr.bf16.mxu0 %v971
        %1193 = vmatpush1.bf16.msra.mxu0 %v970
        %1194 = vmatprep.subr.bf16.mxu0 %v973
        %1195 = vmatpush1.bf16.msra.mxu0 %v972
        %1196 = vmatprep.subr.bf16.mxu0 %v975
        %1197 = vmatpush1.bf16.msra.mxu0 %v974
        %1198 = vmatprep.subr.bf16.mxu0 %v977
        %1199 = vmatpush1.bf16.msra.mxu0 %v976
        %1200 = vmatprep.subr.bf16.mxu0 %v979
        %1201 = vmatpush1.bf16.msra.mxu0 %v978
        %1202 = vmatprep.subr.bf16.mxu0 %v981
        %1203 = vmatpush1.bf16.msra.mxu0 %v980
        %1204 = vmatprep.subr.bf16.mxu0 %v983
        %1205 = vmatpush1.bf16.msra.mxu0 %v982
        %1206 = vmatprep.mubr.bf16.mxu0 %v482
        %1207 = vmatmul.mubr.bf16.gmra.mrb[0].mxu0 %v481
        %v1208 = vpop.f32.mrb[0].mxu0
        %v1209 = vadd.f32 %v1166, %v1208
        %v1210 = vpop.f32.mrb[0].mxu0
        %v1211 = vadd.f32 %v1168, %v1210
        %v1212 = vpop.f32.mrb[0].mxu0
        %v1213 = vadd.f32 %v1170, %v1212
        %v1214 = vpop.f32.mrb[0].mxu0
        %v1215 = vadd.f32 %v1172, %v1214
        %1216 = vdwg.mxu0
        %1217 = vmatprep.subr.bf16.mxu0 %v985
        %1218 = vmatpush1.bf16.msra.mxu0 %v984
        %1219 = vmatprep.subr.bf16.mxu0 0
        %1220 = vmatpush1.bf16.msra.mxu0 0
        %1221 = vmatprep.subr.bf16.mxu0 0
        %1222 = vmatpush1.bf16.msra.mxu0 0
        %1223 = vmatprep.subr.bf16.mxu0 0
        %1224 = vmatpush1.bf16.msra.mxu0 0
        %1225 = vmatprep.subr.bf16.mxu0 0
        %1226 = vmatpush1.bf16.msra.mxu0 0
        %1227 = vmatprep.subr.bf16.mxu0 0
        %1228 = vmatpush1.bf16.msra.mxu0 0
        %1229 = vmatprep.subr.bf16.mxu0 0
        %1230 = vmatpush1.bf16.msra.mxu0 0
        %1231 = vmatprep.subr.bf16.mxu0 0
        %1232 = vmatpush1.bf16.msra.mxu0 0
        %1233 = vmatprep.subr.bf16.mxu0 0
        %1234 = vmatpush1.bf16.msra.mxu0 0
        %1235 = vmatprep.subr.bf16.mxu0 0
        %1236 = vmatpush1.bf16.msra.mxu0 0
        %1237 = vmatprep.subr.bf16.mxu0 0
        %1238 = vmatpush1.bf16.msra.mxu0 0
        %1239 = vmatprep.subr.bf16.mxu0 0
        %1240 = vmatpush1.bf16.msra.mxu0 0
        %1241 = vmatprep.subr.bf16.mxu0 0
        %1242 = vmatpush1.bf16.msra.mxu0 0
        %1243 = vmatprep.subr.bf16.mxu0 0
        %1244 = vmatpush1.bf16.msra.mxu0 0
        %1245 = vmatprep.subr.bf16.mxu0 0
        %1246 = vmatpush1.bf16.msra.mxu0 0
        %1247 = vmatprep.subr.bf16.mxu0 0
        %1248 = vmatpush1.bf16.msra.mxu0 0
        %1249 = vmatprep.mubr.bf16.mxu0 0
        %1250 = vmatmul.mubr.bf16.gmra.mrb[0].mxu0 %v1086
        %v1251 = vpop.f32.mrb[0].mxu0
        %v1252 = vadd.f32 %v1209, %v1251
        %v1253 = vpop.f32.mrb[0].mxu0
        %v1254 = vadd.f32 %v1211, %v1253
        %v1255 = vpop.f32.mrb[0].mxu0
        %v1256 = vadd.f32 %v1213, %v1255
        %v1257 = vpop.f32.mrb[0].mxu0
        %v1258 = vadd.f32 %v1215, %v1257
        %1259 = vdwg.mxu0
        %v1260 = vmax.f32 %v1252, 0.0
        %v1261 = vmax.f32 %v1254, 0.0
        %v1262 = vmax.f32 %v1256, 0.0
        %v1263 = vmax.f32 %v1258, 0.0
        %v1264 = vpack.c.bf16 %v1262, %v1260
        %v1265 = vpack.c.bf16 %v1263, %v1261
        %v1266 = vld [vmem:[#allocation8] sm:$0xf]
        %v1267 = vld [vmem:[#allocation8 + $0x4] sm:$0xf]
        %v1268 = vld [vmem:[#allocation8 + $0x8] sm:$0xf]
        %v1269 = vld [vmem:[#allocation8 + $0xc] sm:$0xf]
        %v1270 = vld [vmem:[#allocation8 + $0x10] sm:$0xf]
        %v1271 = vld [vmem:[#allocation8 + $0x14] sm:$0xf]
        %v1272 = vld [vmem:[#allocation8 + $0x18] sm:$0xf]
        %v1273 = vld [vmem:[#allocation8 + $0x1c] sm:$0xf]
        %v1274 = vld [vmem:[#allocation8 + $0x20] sm:$0xf]
        %v1275 = vld [vmem:[#allocation8 + $0x24] sm:$0xf]
        %v1276 = vld [vmem:[#allocation8 + $0x28] sm:$0xf]
        %v1277 = vld [vmem:[#allocation8 + $0x2c] sm:$0xf]
        %v1278 = vld [vmem:[#allocation8 + $0x30] sm:$0xf]
        %v1279 = vld [vmem:[#allocation8 + $0x34] sm:$0xf]
        %v1280 = vld [vmem:[#allocation8 + $0x38] sm:$0xf]
        %v1281 = vld [vmem:[#allocation8 + $0x3c] sm:$0xf]
        %v1282 = vld [vmem:[#allocation8 + $0x40] sm:$0xf]
        %v1283 = vld [vmem:[#allocation8 + $0x44] sm:$0xf]
        %v1284 = vld [vmem:[#allocation8 + $0x48] sm:$0xf]
        %v1285 = vld [vmem:[#allocation8 + $0x4c] sm:$0xf]
        %v1286 = vld [vmem:[#allocation8 + $0x50] sm:$0xf]
        %v1287 = vld [vmem:[#allocation8 + $0x54] sm:$0xf]
        %v1288 = vld [vmem:[#allocation8 + $0x58] sm:$0xf]
        %v1289 = vld [vmem:[#allocation8 + $0x5c] sm:$0xf]
        %v1290 = vld [vmem:[#allocation8 + $0x60] sm:$0xf]
        %v1291 = vld [vmem:[#allocation8 + $0x64] sm:$0xf]
        %v1292 = vld [vmem:[#allocation8 + $0x68] sm:$0xf]
        %v1293 = vld [vmem:[#allocation8 + $0x6c] sm:$0xf]
        %v1294 = vld [vmem:[#allocation8 + $0x70] sm:$0xf]
        %v1295 = vld [vmem:[#allocation8 + $0x74] sm:$0xf]
        %v1296 = vld [vmem:[#allocation8 + $0x78] sm:$0xf]
        %v1297 = vld [vmem:[#allocation8 + $0x7c] sm:$0xf]
        %v1298 = vld [vmem:[#allocation10] sm:$0x1]
        %v1300 = vlaneseq
        %v1301 = vshrl.u32 %v1300, 7
        %v1302 = vsub.s32 0, %v1301
        %v1303 = vrot.slane %v1298, %v1302
        %v1337 = vunpack.c.l.b16 %v1266
        %v1338 = vunpack.c.l.b16 %v1267
        %v1339 = vunpack.c.l.b16 %v1268
        %v1340 = vunpack.c.l.b16 %v1269
        %v1341 = vunpack.c.l.b16 %v1270
        %v1342 = vunpack.c.l.b16 %v1271
        %v1343 = vunpack.c.l.b16 %v1272
        %v1344 = vunpack.c.l.b16 %v1273
        %v1345 = vunpack.c.l.b16 %v1274
        %v1346 = vunpack.c.l.b16 %v1275
        %v1347 = vunpack.c.l.b16 %v1276
        %v1348 = vunpack.c.l.b16 %v1277
        %v1349 = vunpack.c.l.b16 %v1278
        %v1350 = vunpack.c.l.b16 %v1279
        %v1351 = vunpack.c.l.b16 %v1280
        %v1352 = vunpack.c.l.b16 %v1281
        %v1353 = vunpack.c.l.b16 %v1282
        %v1354 = vunpack.c.l.b16 %v1283
        %v1355 = vunpack.c.l.b16 %v1284
        %v1356 = vunpack.c.l.b16 %v1285
        %v1357 = vunpack.c.l.b16 %v1286
        %v1358 = vunpack.c.l.b16 %v1287
        %v1359 = vunpack.c.l.b16 %v1288
        %v1360 = vunpack.c.l.b16 %v1289
        %v1361 = vunpack.c.l.b16 %v1290
        %v1362 = vunpack.c.l.b16 %v1291
        %v1363 = vunpack.c.l.b16 %v1292
        %v1364 = vunpack.c.l.b16 %v1293
        %v1365 = vunpack.c.l.b16 %v1294
        %v1366 = vunpack.c.l.b16 %v1295
        %v1367 = vunpack.c.l.b16 %v1296
        %v1368 = vunpack.c.l.b16 %v1297
        %v1369 = vpack.c.b16 %v1338, %v1337
        %v1370 = vpack.c.b16 %v1340, %v1339
        %v1371 = vpack.c.b16 %v1342, %v1341
        %v1372 = vpack.c.b16 %v1344, %v1343
        %v1373 = vpack.c.b16 %v1346, %v1345
        %v1374 = vpack.c.b16 %v1348, %v1347
        %v1375 = vpack.c.b16 %v1350, %v1349
        %v1376 = vpack.c.b16 %v1352, %v1351
        %v1377 = vpack.c.b16 %v1354, %v1353
        %v1378 = vpack.c.b16 %v1356, %v1355
        %v1379 = vpack.c.b16 %v1358, %v1357
        %v1380 = vpack.c.b16 %v1360, %v1359
        %v1381 = vpack.c.b16 %v1362, %v1361
        %v1382 = vpack.c.b16 %v1364, %v1363
        %v1383 = vpack.c.b16 %v1366, %v1365
        %v1384 = vpack.c.b16 %v1368, %v1367
        %1401 = vmatprep.subr.bf16.mxu0 0
        %1402 = vmatpush1.bf16.msra.mxu0 %v1369
        %1403 = vmatprep.subr.bf16.mxu0 0
        %1404 = vmatpush1.bf16.msra.mxu0 %v1370
        %1405 = vmatprep.subr.bf16.mxu0 0
        %1406 = vmatpush1.bf16.msra.mxu0 %v1371
        %1407 = vmatprep.subr.bf16.mxu0 0
        %1408 = vmatpush1.bf16.msra.mxu0 %v1372
        %1409 = vmatprep.subr.bf16.mxu0 0
        %1410 = vmatpush1.bf16.msra.mxu0 %v1373
        %1411 = vmatprep.subr.bf16.mxu0 0
        %1412 = vmatpush1.bf16.msra.mxu0 %v1374
        %1413 = vmatprep.subr.bf16.mxu0 0
        %1414 = vmatpush1.bf16.msra.mxu0 %v1375
        %1415 = vmatprep.subr.bf16.mxu0 0
        %1416 = vmatpush1.bf16.msra.mxu0 %v1376
        %1417 = vmatprep.subr.bf16.mxu0 0
        %1418 = vmatpush1.bf16.msra.mxu0 %v1377
        %1419 = vmatprep.subr.bf16.mxu0 0
        %1420 = vmatpush1.bf16.msra.mxu0 %v1378
        %1421 = vmatprep.subr.bf16.mxu0 0
        %1422 = vmatpush1.bf16.msra.mxu0 %v1379
        %1423 = vmatprep.subr.bf16.mxu0 0
        %1424 = vmatpush1.bf16.msra.mxu0 %v1380
        %1425 = vmatprep.subr.bf16.mxu0 0
        %1426 = vmatpush1.bf16.msra.mxu0 %v1381
        %1427 = vmatprep.subr.bf16.mxu0 0
        %1428 = vmatpush1.bf16.msra.mxu0 %v1382
        %1429 = vmatprep.subr.bf16.mxu0 0
        %1430 = vmatpush1.bf16.msra.mxu0 %v1383
        %1431 = vmatprep.subr.bf16.mxu0 0
        %1432 = vmatpush1.bf16.msra.mxu0 %v1384
        %1433 = vmatprep.mubr.bf16.mxu0 %v1265
        %1434 = vmatmul.mubr.bf16.gmra.mrb[0].mxu0 %v1264
        %v1435 = vpop.f32.mrb[0].mxu0
        %v1436 = vadd.f32 %v1303, %v1435
        %v1437 = vpop.f32.mrb[0].mxu0
        %v1438 = vpop.f32.mrb[0].mxu0
        %v1439 = vadd.f32 %v1303, %v1438
        %v1440 = vpop.f32.mrb[0].mxu0
        %1441 = vdwg.mxu0
        %v1442 = vmax.f32 %v1436, 0.0
        %v1443 = vmax.f32 %v1439, 0.0
        %v1444 = vpack.c.bf16 %v1443, %v1442
        %v1445 = vld [vmem:[#allocation11] sm:$0xf]
        %v1446 = vld [vmem:[#allocation11 + $0x4] sm:$0xf]
        %v1447 = vld [vmem:[#allocation11 + $0x8] sm:$0xf]
        %v1448 = vld [vmem:[#allocation11 + $0xc] sm:$0xf]
        %v1449 = vld [vmem:[#allocation11 + $0x10] sm:$0xf]
        %v1450 = vld [vmem:[#allocation11 + $0x14] sm:$0xf]
        %v1451 = vld [vmem:[#allocation11 + $0x18] sm:$0xf]
        %v1452 = vld [vmem:[#allocation11 + $0x1c] sm:$0xf]
        %v1453 = vld [vmem:[#allocation11 + $0x20] sm:$0xf]
        %v1454 = vld [vmem:[#allocation11 + $0x24] sm:$0xf]
        %v1455 = vld [vmem:[#allocation11 + $0x28] sm:$0xf]
        %v1456 = vld [vmem:[#allocation11 + $0x2c] sm:$0xf]
        %v1457 = vld [vmem:[#allocation11 + $0x30] sm:$0xf]
        %v1458 = vld [vmem:[#allocation11 + $0x34] sm:$0xf]
        %v1459 = vld [vmem:[#allocation11 + $0x38] sm:$0xf]
        %v1460 = vld [vmem:[#allocation11 + $0x3c] sm:$0xf]
        %v1461 = vld [vmem:[#allocation13] sm:$0x1]
        %v1463 = vlaneseq
        %v1464 = vshrl.u32 %v1463, 7
        %v1465 = vsub.s32 0, %v1464
        %v1466 = vrot.slane %v1461, %v1465
        %v1484 = vunpack.c.l.b16 %v1445
        %v1485 = vunpack.c.l.b16 %v1446
        %v1486 = vunpack.c.l.b16 %v1447
        %v1487 = vunpack.c.l.b16 %v1448
        %v1488 = vunpack.c.l.b16 %v1449
        %v1489 = vunpack.c.l.b16 %v1450
        %v1490 = vunpack.c.l.b16 %v1451
        %v1491 = vunpack.c.l.b16 %v1452
        %v1492 = vunpack.c.l.b16 %v1453
        %v1493 = vunpack.c.l.b16 %v1454
        %v1494 = vunpack.c.l.b16 %v1455
        %v1495 = vunpack.c.l.b16 %v1456
        %v1496 = vunpack.c.l.b16 %v1457
        %v1497 = vunpack.c.l.b16 %v1458
        %v1498 = vunpack.c.l.b16 %v1459
        %v1499 = vunpack.c.l.b16 %v1460
        %v1500 = vpack.c.b16 %v1485, %v1484
        %v1501 = vpack.c.b16 %v1487, %v1486
        %v1502 = vpack.c.b16 %v1489, %v1488
        %v1503 = vpack.c.b16 %v1491, %v1490
        %v1504 = vpack.c.b16 %v1493, %v1492
        %v1505 = vpack.c.b16 %v1495, %v1494
        %v1506 = vpack.c.b16 %v1497, %v1496
        %v1507 = vpack.c.b16 %v1499, %v1498
        %1516 = vmatprep.subr.bf16.mxu0 0
        %1517 = vmatpush1.bf16.msra.mxu0 %v1500
        %1518 = vmatprep.subr.bf16.mxu0 0
        %1519 = vmatpush1.bf16.msra.mxu0 %v1501
        %1520 = vmatprep.subr.bf16.mxu0 0
        %1521 = vmatpush1.bf16.msra.mxu0 %v1502
        %1522 = vmatprep.subr.bf16.mxu0 0
        %1523 = vmatpush1.bf16.msra.mxu0 %v1503
        %1524 = vmatprep.subr.bf16.mxu0 0
        %1525 = vmatpush1.bf16.msra.mxu0 %v1504
        %1526 = vmatprep.subr.bf16.mxu0 0
        %1527 = vmatpush1.bf16.msra.mxu0 %v1505
        %1528 = vmatprep.subr.bf16.mxu0 0
        %1529 = vmatpush1.bf16.msra.mxu0 %v1506
        %1530 = vmatprep.subr.bf16.mxu0 0
        %1531 = vmatpush1.bf16.msra.mxu0 %v1507
        %1532 = vmatprep.subr.bf16.mxu0 0
        %1533 = vmatpush1.bf16.msra.mxu0 0
        %1534 = vmatprep.subr.bf16.mxu0 0
        %1535 = vmatpush1.bf16.msra.mxu0 0
        %1536 = vmatprep.subr.bf16.mxu0 0
        %1537 = vmatpush1.bf16.msra.mxu0 0
        %1538 = vmatprep.subr.bf16.mxu0 0
        %1539 = vmatpush1.bf16.msra.mxu0 0
        %1540 = vmatprep.subr.bf16.mxu0 0
        %1541 = vmatpush1.bf16.msra.mxu0 0
        %1542 = vmatprep.subr.bf16.mxu0 0
        %1543 = vmatpush1.bf16.msra.mxu0 0
        %1544 = vmatprep.subr.bf16.mxu0 0
        %1545 = vmatpush1.bf16.msra.mxu0 0
        %1546 = vmatprep.subr.bf16.mxu0 0
        %1547 = vmatpush1.bf16.msra.mxu0 0
        %1548 = vmatprep.mubr.bf16.mxu0 0
        %1549 = vmatmul.mubr.bf16.gmra.mrb[0].mxu0 %v1444
        %v1550 = vpop.f32.mrb[0].mxu0
        %v1551 = vadd.f32 %v1466, %v1550
        %v1552 = vpop.f32.mrb[0].mxu0
        %v1553 = vpop.f32.mrb[0].mxu0
        %v1554 = vadd.f32 %v1466, %v1553
        %v1555 = vpop.f32.mrb[0].mxu0
        %1556 = vdwg.mxu0
        %v1557 = vmax.f32 %v1551, 0.0
        %v1558 = vmax.f32 %v1554, 0.0
        %v1559 = vpack.c.bf16 %v1558, %v1557
        %v1560 = vld [vmem:[#allocation14] sm:$0xf]
        %v1561 = vld [vmem:[#allocation14 + $0x4] sm:$0xf]
        %v1562 = vld [vmem:[#allocation14 + $0x8] sm:$0xf]
        %v1563 = vld [vmem:[#allocation14 + $0xc] sm:$0xf]
        %v1564 = vld [vmem:[#allocation14 + $0x10] sm:$0xf]
        %v1565 = vld [vmem:[#allocation14 + $0x14] sm:$0xf]
        %v1566 = vld [vmem:[#allocation14 + $0x18] sm:$0xf]
        %v1567 = vld [vmem:[#allocation14 + $0x1c] sm:$0xf]
        %v1568 = vld [vmem:[#allocation14 + $0x20] sm:$0xf]
        %v1569 = vld [vmem:[#allocation14 + $0x24] sm:$0xf]
        %v1570 = vld [vmem:[#allocation14 + $0x28] sm:$0xf]
        %v1571 = vld [vmem:[#allocation14 + $0x2c] sm:$0xf]
        %v1572 = vld [vmem:[#allocation14 + $0x30] sm:$0xf]
        %v1573 = vld [vmem:[#allocation14 + $0x34] sm:$0xf]
        %v1574 = vld [vmem:[#allocation14 + $0x38] sm:$0xf]
        %v1575 = vld [vmem:[#allocation14 + $0x3c] sm:$0xf]
        %v1576 = vld [vmem:[#allocation16] sm:$0x1]
        %v1578 = vlaneseq
        %v1579 = vshrl.u32 %v1578, 7
        %v1580 = vsub.s32 0, %v1579
        %v1581 = vrot.slane %v1576, %v1580
        %v1599 = vunpack.c.l.b16 %v1560
        %v1600 = vunpack.c.l.b16 %v1561
        %v1601 = vunpack.c.l.b16 %v1562
        %v1602 = vunpack.c.l.b16 %v1563
        %v1603 = vunpack.c.l.b16 %v1564
        %v1604 = vunpack.c.l.b16 %v1565
        %v1605 = vunpack.c.l.b16 %v1566
        %v1606 = vunpack.c.l.b16 %v1567
        %v1607 = vunpack.c.l.b16 %v1568
        %v1608 = vunpack.c.l.b16 %v1569
        %v1609 = vunpack.c.l.b16 %v1570
        %v1610 = vunpack.c.l.b16 %v1571
        %v1611 = vunpack.c.l.b16 %v1572
        %v1612 = vunpack.c.l.b16 %v1573
        %v1613 = vunpack.c.l.b16 %v1574
        %v1614 = vunpack.c.l.b16 %v1575
        %v1615 = vpack.c.b16 %v1600, %v1599
        %v1616 = vpack.c.b16 %v1602, %v1601
        %v1617 = vpack.c.b16 %v1604, %v1603
        %v1618 = vpack.c.b16 %v1606, %v1605
        %v1619 = vpack.c.b16 %v1608, %v1607
        %v1620 = vpack.c.b16 %v1610, %v1609
        %v1621 = vpack.c.b16 %v1612, %v1611
        %v1622 = vpack.c.b16 %v1614, %v1613
        %1631 = vmatprep.subr.bf16.mxu0 0
        %1632 = vmatpush1.bf16.msra.mxu0 %v1615
        %1633 = vmatprep.subr.bf16.mxu0 0
        %1634 = vmatpush1.bf16.msra.mxu0 %v1616
        %1635 = vmatprep.subr.bf16.mxu0 0
        %1636 = vmatpush1.bf16.msra.mxu0 %v1617
        %1637 = vmatprep.subr.bf16.mxu0 0
        %1638 = vmatpush1.bf16.msra.mxu0 %v1618
        %1639 = vmatprep.subr.bf16.mxu0 0
        %1640 = vmatpush1.bf16.msra.mxu0 %v1619
        %1641 = vmatprep.subr.bf16.mxu0 0
        %1642 = vmatpush1.bf16.msra.mxu0 %v1620
        %1643 = vmatprep.subr.bf16.mxu0 0
        %1644 = vmatpush1.bf16.msra.mxu0 %v1621
        %1645 = vmatprep.subr.bf16.mxu0 0
        %1646 = vmatpush1.bf16.msra.mxu0 %v1622
        %1647 = vmatprep.subr.bf16.mxu0 0
        %1648 = vmatpush1.bf16.msra.mxu0 0
        %1649 = vmatprep.subr.bf16.mxu0 0
        %1650 = vmatpush1.bf16.msra.mxu0 0
        %1651 = vmatprep.subr.bf16.mxu0 0
        %1652 = vmatpush1.bf16.msra.mxu0 0
        %1653 = vmatprep.subr.bf16.mxu0 0
        %1654 = vmatpush1.bf16.msra.mxu0 0
        %1655 = vmatprep.subr.bf16.mxu0 0
        %1656 = vmatpush1.bf16.msra.mxu0 0
        %1657 = vmatprep.subr.bf16.mxu0 0
        %1658 = vmatpush1.bf16.msra.mxu0 0
        %1659 = vmatprep.subr.bf16.mxu0 0
        %1660 = vmatpush1.bf16.msra.mxu0 0
        %1661 = vmatprep.subr.bf16.mxu0 0
        %1662 = vmatpush1.bf16.msra.mxu0 0
        %1663 = vmatprep.mubr.bf16.mxu0 0
        %1664 = vmatmul.mubr.bf16.gmra.mrb[0].mxu0 %v1559
        %v1665 = vpop.f32.mrb[0].mxu0
        %v1666 = vadd.f32 %v1581, %v1665
        %v1667 = vpop.f32.mrb[0].mxu0
        %v1668 = vpop.f32.mrb[0].mxu0
        %v1669 = vadd.f32 %v1581, %v1668
        %v1670 = vpop.f32.mrb[0].mxu0
        %1671 = vdwg.mxu0
        %1672 = vmax.xlane.f32.xlu0 %v1666
        %v1673 = vpop.xlane.xlu0 %1672
        %1674 = vmax.xlane.f32.xlu0 %v1669
        %v1675 = vpop.xlane.xlu0 %1674
        %v1676 = vsub.f32 %v1666, %v1673
        %v1677 = vsub.f32 %v1669, %v1675
        %v1678 = vmul.f32 %v1676, 1.442695
        %v1679 = vpow.pop %v1678
        %v1680 = vmul.f32 %v1677, 1.442695
        %v1681 = vpow.pop %v1680
        %1682 = vadd.xlane.f32.xlu0 %v1679
        %v1683 = vpop.xlane.xlu0 %1682
        %1684 = vadd.xlane.f32.xlu0 %v1681
        %v1685 = vpop.xlane.xlu0 %1684
        %v1686 = vlog2.pop %v1683
        %v1687 = vmul.f32 %v1686, 0.6931472
        %v1688 = vlog2.pop %v1685
        %v1689 = vmul.f32 %v1688, 0.6931472
        %v1690 = vsub.f32 %v1676, %v1687
        %v1691 = vsub.f32 %v1677, %v1689
        %1692 = vst [vmem:[%s459] sm:$0xff] %v1690
        %1693 = vst [vmem:[%s459 + $0x8] sm:$0xff] %v1691
        %s1694 = sand.u32 %s232, 1
        %s1695 = scalar_lea.sflag [#allocation4], %s1694
        %s1696 = sand.u32 %s232, 1
        %s1697 = smul.addr %s1696, 16
        %s1698 = scalar_lea.vmem [#allocation17], %s1697
        // Predicated region
        $region93: #{elephantnet2_forward.1} parent=55 // pred_check
          %p1699 = pneg %p242
        $region94: #{elephantnet2_forward.1} parent=55 // pred_check_branch
          %1701 = sbr.rel (%p1699) target = $region96
        $region95: #{elephantnet2_forward.1} parent=55 // pred_region
          %s1702 = smul.u32 2, %s30
          %s1704 = ssub.s32 256, 256
          %1705 = vsyncadd %s1695, %s1704
          %s1706 = smul.addr %s1702, 128
          %s1707 = scalar_lea.hbm %s9, %s1706
          %s1708 = sshll.u32 %s1698, 4
          %s1709 = int_to_ptr.vmem [resolvable:$true] %s1708
          %1714 = dma.vmem_to_hbm [thread:$0]  %s1709, 256, %s1707, %s1695, 128, 128, 8
        $region96: #{elephantnet2_forward.1} parent=55 // pred_fallthru
          _
      $region56: #{elephantnet2_forward.1} parent=5 // pred_fallthru
        _
      %p1715 = scmp.le.s32.totalorder 2, %s25
      // Predicated region
      $region97: #{elephantnet2_forward.1} parent=5 // pred_check
        %p1716 = pneg %p1715
      $region98: #{elephantnet2_forward.1} parent=5 // pred_check_branch
        %1718 = sbr.rel (%p1716) target = $region100
      $region99: #{elephantnet2_forward.1} parent=5 // pred_region
        %s1719 = ssub.s32 %s25, 2
        // Predicated region
        $region101: #{elephantnet2_forward.1} parent=99 // pred_check
          %p1720 = pneg %p248
        $region102: #{elephantnet2_forward.1} parent=99 // pred_check_branch
          %1722 = sbr.rel (%p1720) target = $region104
        $region103: #{elephantnet2_forward.1} parent=99 // pred_region
          %s1723 = sand.u32 %s233, 1
          %s1724 = scalar_lea.sflag [#allocation4], %s1723
          %s1725 = sand.u32 %s233, 1
          %s1726 = smul.addr %s1725, 16
          %s1727 = scalar_lea.vmem [#allocation17], %s1726
          %1728 = dma.done %s1724, 256
        $region104: #{elephantnet2_forward.1} parent=99 // pred_fallthru
          _
      $region100: #{elephantnet2_forward.1} parent=5 // pred_fallthru
        _
    $region6: #{elephantnet2_forward.1} parent=1 // loop_footer
      %s29 = sadd.s32 1, %s25
    $region7: #{elephantnet2_forward.1} parent=1 // loop_footer_branch
      %24 = sbr.rel target = $region3
    $region8: #{elephantnet2_forward.1} parent=1 // loop_exit
      _
    %1729 = vsyncpa [#allocation3], 1
    %s1730 = scalar_lea.sflag [#allocation3], 1
    %1731 = vsyncpa %s1730, 1
    %1732 = vsyncpa [#allocation6], 1
    %1733 = vsyncpa [#allocation9], 1
    %1734 = vsyncpa [#allocation12], 1
    %1735 = vsyncpa [#allocation15], 1
    %1736 = vsyncpa [#allocation4], 1
    %s1737 = scalar_lea.sflag [#allocation4], 1
    %1738 = vsyncpa %s1737, 1

</llo_original>
